<compile_context>
chip_gen: v5e
topology: v5e:2x2
jax: 0.10.0
libtpu: 0.0.40
codegen_flags: <defaults>
</compile_context>

<pallas_src>
import functools
import math

import jax
import jax.numpy as jnp
from jax.experimental import pallas as pl
from jax.experimental.pallas import tpu as pltpu

ACT_DTYPE = jnp.bfloat16      # matmul-operand / activation dtype
LN_EPS = 1e-12                # matches torch.nn.LayerNorm default in HF BERT


def _pick_tile_m(m, desired=256):
    """Largest row tile <= desired that divides m exactly (prefer multiples of 8 sublanes)."""
    desired = min(desired, m)
    fallback = None
    for t in range(desired, 0, -1):
        if m % t == 0:
            if t % 8 == 0:
                return t
            if fallback is None:
                fallback = t
    return fallback if fallback is not None else m


# ----------------------------- Pallas kernels -----------------------------

def _dense_kernel(x_ref, w_ref, b_ref, o_ref, *, activation):
    """y = act(x @ W + b). x:(tm,K) bf16, w:(K,N) bf16, b:(1,N) f32 -> o:(tm,N) bf16."""
    acc = jnp.dot(x_ref[...], w_ref[...], preferred_element_type=jnp.float32)
    acc = acc + b_ref[...]
    if activation == "gelu":
        # TODO(synk): HF BERT uses erf-based GELU; tanh approximation used here (clean lowering).
        acc = jax.nn.gelu(acc, approximate=True)
    o_ref[...] = acc.astype(o_ref.dtype)


def dense(x, w, b, activation=None, tile_m=256):
    M, K = x.shape
    _, N = w.shape
    tm = _pick_tile_m(M, tile_m)
    return pl.pallas_call(
        functools.partial(_dense_kernel, activation=activation),
        out_shape=jax.ShapeDtypeStruct((M, N), ACT_DTYPE),
        grid=(M // tm,),
        in_specs=[
            pl.BlockSpec((tm, K), lambda i: (i, 0)),
            pl.BlockSpec((K, N), lambda i: (0, 0)),   # weight resident across grid steps
            pl.BlockSpec((1, N), lambda i: (0, 0)),
        ],
        out_specs=pl.BlockSpec((tm, N), lambda i: (i, 0)),
        compiler_params=pltpu.CompilerParams(dimension_semantics=("parallel",)),
    )(x, w, b)


def _dense_res_ln_kernel(x_ref, w_ref, b_ref, r_ref, g_ref, bt_ref, o_ref):
    """o = LayerNorm(x @ W + b + residual) — fused projection + residual + LN."""
    acc = jnp.dot(x_ref[...], w_ref[...], preferred_element_type=jnp.float32)
    acc = acc + b_ref[...] + r_ref[...].astype(jnp.float32)
    mu = jnp.mean(acc, axis=-1, keepdims=True)
    var = jnp.mean(jnp.square(acc - mu), axis=-1, keepdims=True)
    y = (acc - mu) * jax.lax.rsqrt(var + LN_EPS)
    o_ref[...] = (y * g_ref[...] + bt_ref[...]).astype(o_ref.dtype)


def dense_residual_layernorm(x, w, b, residual, gamma, beta, tile_m=256):
    M, K = x.shape
    _, N = w.shape
    tm = _pick_tile_m(M, tile_m)
    return pl.pallas_call(
        _dense_res_ln_kernel,
        out_shape=jax.ShapeDtypeStruct((M, N), ACT_DTYPE),
        grid=(M // tm,),
        in_specs=[
            pl.BlockSpec((tm, K), lambda i: (i, 0)),
            pl.BlockSpec((K, N), lambda i: (0, 0)),
            pl.BlockSpec((1, N), lambda i: (0, 0)),
            pl.BlockSpec((tm, N), lambda i: (i, 0)),
            pl.BlockSpec((1, N), lambda i: (0, 0)),
            pl.BlockSpec((1, N), lambda i: (0, 0)),
        ],
        out_specs=pl.BlockSpec((tm, N), lambda i: (i, 0)),
        compiler_params=pltpu.CompilerParams(dimension_semantics=("parallel",)),
    )(x, w, b, residual, gamma, beta)


def _layernorm_kernel(x_ref, g_ref, b_ref, o_ref):
    """LayerNorm over the last axis (no residual) — used for the embedding LN."""
    x = x_ref[...].astype(jnp.float32)
    mu = jnp.mean(x, axis=-1, keepdims=True)
    var = jnp.mean(jnp.square(x - mu), axis=-1, keepdims=True)
    y = (x - mu) * jax.lax.rsqrt(var + LN_EPS)
    o_ref[...] = (y * g_ref[...] + b_ref[...]).astype(o_ref.dtype)


def layernorm(x, gamma, beta, tile_m=256):
    M, H = x.shape
    tm = _pick_tile_m(M, tile_m)
    return pl.pallas_call(
        _layernorm_kernel,
        out_shape=jax.ShapeDtypeStruct((M, H), ACT_DTYPE),
        grid=(M // tm,),
        in_specs=[
            pl.BlockSpec((tm, H), lambda i: (i, 0)),
            pl.BlockSpec((1, H), lambda i: (0, 0)),
            pl.BlockSpec((1, H), lambda i: (0, 0)),
        ],
        out_specs=pl.BlockSpec((tm, H), lambda i: (i, 0)),
        compiler_params=pltpu.CompilerParams(dimension_semantics=("parallel",)),
    )(x, gamma, beta)


def _attention_kernel(q_ref, k_ref, v_ref, bias_ref, o_ref, *, scale):
    """softmax(Q K^T * scale + mask_bias) V for one (batch, head)."""
    q = q_ref[...]            # (S, Dh) bf16
    k = k_ref[...]
    v = v_ref[...]
    bias = bias_ref[...]      # (1, S) f32; (1 - mask) * -10000 like HF BERT
    s = jax.lax.dot_general(q, k, (((1,), (1,)), ((), ())),
                            preferred_element_type=jnp.float32) * scale
    s = s + bias
    s = s - jnp.max(s, axis=-1, keepdims=True)
    p = jnp.exp(s)
    inv = pl.reciprocal(jnp.sum(p, axis=-1, keepdims=True), approx=True)
    p = (p * inv).astype(v.dtype)
    o = jax.lax.dot_general(p, v, (((1,), (0,)), ((), ())),
                            preferred_element_type=jnp.float32)
    o_ref[...] = o.astype(o_ref.dtype)


def attention(q, k, v, mask_bias):
    """q/k/v: (B, nH, S, Dh); mask_bias: (B, 1, 1, S) f32."""
    B, nH, S, Dh = q.shape
    scale = 1.0 / math.sqrt(Dh)
    # TODO(synk): for long sequences (S >= 1024) switch to flash-style KV tiling with online
    # softmax so the per-step score tile stays within v7x's 64 MiB VMEM.
    qkv_spec = pl.BlockSpec((None, None, S, Dh), lambda b, h: (b, h, 0, 0))
    return pl.pallas_call(
        functools.partial(_attention_kernel, scale=scale),
        out_shape=jax.ShapeDtypeStruct((B, nH, S, Dh), ACT_DTYPE),
        grid=(B, nH),
        in_specs=[qkv_spec, qkv_spec, qkv_spec,
                  pl.BlockSpec((None, None, 1, S), lambda b, h: (b, 0, 0, 0))],
        out_specs=pl.BlockSpec((None, None, S, Dh), lambda b, h: (b, h, 0, 0)),
        compiler_params=pltpu.CompilerParams(
            dimension_semantics=("parallel", "parallel")),
    )(q, k, v, mask_bias)


# ----------------------------- BERT model (glue) -----------------------------

def init_params(key, vocab=64, hidden=32, n_layers=2, n_heads=4,
                intermediate=64, max_pos=16, type_vocab=2):
    def nrm(k, shape, dtype=jnp.float32):
        return (0.02 * jax.random.normal(k, shape)).astype(dtype)

    keys = iter(jax.random.split(key, 8 + 8 * n_layers))
    p = {
        "word_emb": nrm(next(keys), (vocab, hidden)),
        "pos_emb": nrm(next(keys), (max_pos, hidden)),
        "type_emb": nrm(next(keys), (type_vocab, hidden)),
        "emb_ln_g": jnp.ones((1, hidden), jnp.float32),
        "emb_ln_b": jnp.zeros((1, hidden), jnp.float32),
        "layers": [],
    }
    for _ in range(n_layers):
        wq = nrm(next(keys), (hidden, hidden), ACT_DTYPE)
        wk = nrm(next(keys), (hidden, hidden), ACT_DTYPE)
        wv = nrm(next(keys), (hidden, hidden), ACT_DTYPE)
        layer = {
            # Q/K/V fused into one (H, 3H) weight -> single MXU pass over the token tile.
            "wqkv": jnp.concatenate([wq, wk, wv], axis=1),
            "bqkv": jnp.zeros((1, 3 * hidden), jnp.float32),
            "wo": nrm(next(keys), (hidden, hidden), ACT_DTYPE),
            "bo": jnp.zeros((1, hidden), jnp.float32),
            "ln1_g": jnp.ones((1, hidden), jnp.float32),
            "ln1_b": jnp.zeros((1, hidden), jnp.float32),
            "w1": nrm(next(keys), (hidden, intermediate), ACT_DTYPE),
            "b1": jnp.zeros((1, intermediate), jnp.float32),
            "w2": nrm(next(keys), (intermediate, hidden), ACT_DTYPE),
            "b2": jnp.zeros((1, hidden), jnp.float32),
            "ln2_g": jnp.ones((1, hidden), jnp.float32),
            "ln2_b": jnp.zeros((1, hidden), jnp.float32),
        }
        p["layers"].append(layer)
    return p


def encoder_layer(x, mask_bias, p, B, S, n_heads):
    M, H = x.shape
    Dh = H // n_heads

    # Fused QKV projection: one MXU pass over the activations instead of three.
    qkv = dense(x, p["wqkv"], p["bqkv"])                       # (M, 3H) bf16

    # Head split (layout plumbing in XLA; all matmul/softmax compute stays in Pallas).
    qkv = qkv.reshape(B, S, 3, n_heads, Dh).transpose(2, 0, 3, 1, 4)  # (3, B, nH, S, Dh)
    q, k, v = qkv[0], qkv[1], qkv[2]

    ctx = attention(q, k, v, mask_bias)                        # (B, nH, S, Dh)
    ctx = ctx.transpose(0, 2, 1, 3).reshape(M, H)

    # Attention output projection + residual + LayerNorm fused into one kernel.
    x = dense_residual_layernorm(ctx, p["wo"], p["bo"], x, p["ln1_g"], p["ln1_b"])

    # FFN: W1 + bias + GELU fused; W2 + bias + residual + LayerNorm fused.
    h = dense(x, p["w1"], p["b1"], activation="gelu")
    x = dense_residual_layernorm(h, p["w2"], p["b2"], x, p["ln2_g"], p["ln2_b"])
    return x


def bert_classifier_forward(params, sentence_ids, mask, *, n_heads):
    """Equivalent of BERT_Classifier.forward: bert(ids, attention_mask)[0][:, 0, :]."""
    B, S = sentence_ids.shape
    H = params["word_emb"].shape[1]

    # Embeddings (lookups are glue; normalization runs in the Pallas layer-norm kernel).
    we = jnp.take(params["word_emb"], sentence_ids, axis=0)    # (B, S, H)
    pe = params["pos_emb"][:S][None, :, :]                     # (1, S, H)
    te = params["type_emb"][0][None, None, :]                  # token_type_ids = 0
    emb = (we + pe + te).astype(jnp.float32).reshape(B * S, H)
    x = layernorm(emb, params["emb_ln_g"], params["emb_ln_b"])  # (B*S, H) bf16

    # Extended attention mask, HF-style: (1 - mask) * -10000, shape (B, 1, 1, S), f32.
    mask_bias = ((1.0 - mask.astype(jnp.float32)) * -10000.0)[:, None, None, :]

    for layer in params["layers"]:
        x = encoder_layer(x, mask_bias, layer, B, S, n_heads)

    x = x.reshape(B, S, H)
    return x[:, 0, :].astype(jnp.float32)  # [CLS] token embedding


# ----------------------------- demo -----------------------------

if __name__ == "__main__":
    key = jax.random.PRNGKey(0)
    k_param, k_ids = jax.random.split(key)

    B, S, VOCAB, HIDDEN, N_HEADS = 2, 8, 64, 32, 4
    params = init_params(k_param, vocab=VOCAB, hidden=HIDDEN, n_layers=2,
                         n_heads=N_HEADS, intermediate=64, max_pos=16)

    sentence_ids = jax.random.randint(k_ids, (B, S), 0, VOCAB, dtype=jnp.int32)
    mask = jnp.ones((B, S), jnp.int32).at[1, 6:].set(0)  # pad last 2 tokens of example 1

    # n_heads is bound statically (Python int) so reshapes stay concrete under jit.
    fwd = jax.jit(functools.partial(bert_classifier_forward, n_heads=N_HEADS))
    out = fwd(params, sentence_ids, mask)
    out = jax.block_until_ready(out)

    assert out.shape == (B, HIDDEN) and out.dtype == jnp.float32
    assert bool(jnp.all(jnp.isfinite(out)))
    print("KERNEL_OK")
</pallas_src>

<mosaic_0001>
module attributes {stable_mosaic.version = 11 : i64} {
  func.func @_attention_kernel(%arg0: i32, %arg1: i32, %arg2: memref<1x1x8x8xbf16, #tpu.memory_space<vmem>>, %arg3: memref<1x1x8x8xbf16, #tpu.memory_space<vmem>>, %arg4: memref<1x1x8x8xbf16, #tpu.memory_space<vmem>>, %arg5: memref<1x1x1x8xf32, #tpu.memory_space<vmem>>, %arg6: memref<1x1x8x8xbf16, #tpu.memory_space<vmem>>) attributes {dimension_semantics = [#tpu.dimension_semantics<parallel>, #tpu.dimension_semantics<parallel>], iteration_bounds = array<i64: 2, 4>, scalar_prefetch = 0 : i64, scratch_operands = 0 : i64, tpu.core_type = #tpu.core_type<tc>, window_params = [{transform_indices = @transform_0, window_bounds = array<i64: 1, 1, 8, 8>}, {transform_indices = @transform_1, window_bounds = array<i64: 1, 1, 8, 8>}, {transform_indices = @transform_2, window_bounds = array<i64: 1, 1, 8, 8>}, {transform_indices = @transform_3, window_bounds = array<i64: 1, 1, 1, 8>}, {transform_indices = @transform_4, window_bounds = array<i64: 1, 1, 8, 8>}]} {
    %c0 = arith.constant 0 : index
    %c0_0 = arith.constant 0 : index
    %c0_1 = arith.constant 0 : index
    %c0_2 = arith.constant 0 : index
    %0 = vector.load %arg2[%c0, %c0_0, %c0_1, %c0_2] : memref<1x1x8x8xbf16, #tpu.memory_space<vmem>>, vector<1x1x8x8xbf16>
    %1 = vector.shape_cast %0 : vector<1x1x8x8xbf16> to vector<8x8xbf16>
    %c0_3 = arith.constant 0 : index
    %c0_4 = arith.constant 0 : index
    %c0_5 = arith.constant 0 : index
    %c0_6 = arith.constant 0 : index
    %2 = vector.load %arg3[%c0_3, %c0_4, %c0_5, %c0_6] : memref<1x1x8x8xbf16, #tpu.memory_space<vmem>>, vector<1x1x8x8xbf16>
    %3 = vector.shape_cast %2 : vector<1x1x8x8xbf16> to vector<8x8xbf16>
    %c0_7 = arith.constant 0 : index
    %c0_8 = arith.constant 0 : index
    %c0_9 = arith.constant 0 : index
    %c0_10 = arith.constant 0 : index
    %4 = vector.load %arg4[%c0_7, %c0_8, %c0_9, %c0_10] : memref<1x1x8x8xbf16, #tpu.memory_space<vmem>>, vector<1x1x8x8xbf16>
    %5 = vector.shape_cast %4 : vector<1x1x8x8xbf16> to vector<8x8xbf16>
    %c0_11 = arith.constant 0 : index
    %c0_12 = arith.constant 0 : index
    %c0_13 = arith.constant 0 : index
    %c0_14 = arith.constant 0 : index
    %6 = vector.load %arg5[%c0_11, %c0_12, %c0_13, %c0_14] : memref<1x1x1x8xf32, #tpu.memory_space<vmem>>, vector<1x1x1x8xf32>
    %7 = vector.shape_cast %6 : vector<1x1x1x8xf32> to vector<1x8xf32>
    %cst = arith.constant dense<0.000000e+00> : vector<8x8xf32>
    %8 = tpu.matmul %1, %3, %cst {dimension_numbers = #tpu.dot_dimension_numbers<[1], [1], [0], [0], [0, 0, 1, 0], [], []>} : vector<8x8xbf16>, vector<8x8xbf16>, vector<8x8xf32> -> vector<8x8xf32>
    %cst_15 = arith.constant 0.353553385 : f32
    %9 = vector.broadcast %cst_15 : f32 to vector<8x8xf32>
    %10 = arith.mulf %8, %9 : vector<8x8xf32>
    %11 = vector.broadcast %7 : vector<1x8xf32> to vector<8x8xf32>
    %12 = arith.addf %10, %11 : vector<8x8xf32>
    %cst_16 = arith.constant dense<0xFF800000> : vector<8xf32>
    %13 = vector.multi_reduction <maximumf>, %12, %cst_16 [1] : vector<8x8xf32> to vector<8xf32>
    %14 = vector.shape_cast %13 : vector<8xf32> to vector<8x1xf32>
    %15 = vector.broadcast %14 : vector<8x1xf32> to vector<8x8xf32>
    %16 = arith.subf %12, %15 : vector<8x8xf32>
    %17 = math.exp %16 : vector<8x8xf32>
    %cst_17 = arith.constant dense<0.000000e+00> : vector<8xf32>
    %18 = vector.multi_reduction <add>, %17, %cst_17 [1] : vector<8x8xf32> to vector<8xf32>
    %19 = vector.shape_cast %18 : vector<8xf32> to vector<8x1xf32>
    %20 = tpu.reciprocal %19 {approx = true} : vector<8x1xf32> -> vector<8x1xf32>
    %21 = vector.broadcast %20 : vector<8x1xf32> to vector<8x8xf32>
    %22 = arith.mulf %17, %21 : vector<8x8xf32>
    %23 = arith.truncf %22 : vector<8x8xf32> to vector<8x8xbf16>
    %cst_18 = arith.constant dense<0.000000e+00> : vector<8x8xf32>
    %24 = tpu.matmul %23, %5, %cst_18 {dimension_numbers = #tpu.dot_dimension_numbers<[1], [0], [0], [1], [0, 0, 1, 1], [], []>} : vector<8x8xbf16>, vector<8x8xbf16>, vector<8x8xf32> -> vector<8x8xf32>
    %25 = arith.truncf %24 : vector<8x8xf32> to vector<8x8xbf16>
    %c0_19 = arith.constant 0 : index
    %c0_20 = arith.constant 0 : index
    %c0_21 = arith.constant 0 : index
    %c0_22 = arith.constant 0 : index
    %26 = vector.load %arg6[%c0_19, %c0_20, %c0_21, %c0_22] : memref<1x1x8x8xbf16, #tpu.memory_space<vmem>>, vector<1x1x8x8xbf16>
    %27 = vector.shape_cast %26 : vector<1x1x8x8xbf16> to vector<8x8xbf16>
    %28 = vector.shape_cast %25 : vector<8x8xbf16> to vector<1x1x8x8xbf16>
    tpu.vector_store %arg6[%c0_19, %c0_20, %c0_21, %c0_22], %28 {strides = array<i32>} : memref<1x1x8x8xbf16, #tpu.memory_space<vmem>>, vector<1x1x8x8xbf16>,
    return
  }
  func.func @transform_0(%arg0: i32, %arg1: i32) -> (i32, i32, i32, i32) {
    %c0_i32 = arith.constant 0 : i32
    %c0_i32_0 = arith.constant 0 : i32
    %c0_i32_1 = arith.constant 0 : i32
    return %arg0, %arg1, %c0_i32, %c0_i32_0 : i32, i32, i32, i32
  }
  func.func @transform_1(%arg0: i32, %arg1: i32) -> (i32, i32, i32, i32) {
    %c0_i32 = arith.constant 0 : i32
    %c0_i32_0 = arith.constant 0 : i32
    %c0_i32_1 = arith.constant 0 : i32
    return %arg0, %arg1, %c0_i32, %c0_i32_0 : i32, i32, i32, i32
  }
  func.func @transform_2(%arg0: i32, %arg1: i32) -> (i32, i32, i32, i32) {
    %c0_i32 = arith.constant 0 : i32
    %c0_i32_0 = arith.constant 0 : i32
    %c0_i32_1 = arith.constant 0 : i32
    return %arg0, %arg1, %c0_i32, %c0_i32_0 : i32, i32, i32, i32
  }
  func.func @transform_3(%arg0: i32, %arg1: i32) -> (i32, i32, i32, i32) {
    %c0_i32 = arith.constant 0 : i32
    %c0_i32_0 = arith.constant 0 : i32
    %c0_i32_1 = arith.constant 0 : i32
    %c0_i32_2 = arith.constant 0 : i32
    return %arg0, %c0_i32, %c0_i32_0, %c0_i32_1 : i32, i32, i32, i32
  }
  func.func @transform_4(%arg0: i32, %arg1: i32) -> (i32, i32, i32, i32) {
    %c0_i32 = arith.constant 0 : i32
    %c0_i32_0 = arith.constant 0 : i32
    %c0_i32_1 = arith.constant 0 : i32
    return %arg0, %arg1, %c0_i32, %c0_i32_0 : i32, i32, i32, i32
  }
}

module attributes {stable_mosaic.version = 11 : i64} {
  func.func @_layernorm_kernel(%arg0: i32, %arg1: memref<16x32xf32, #tpu.memory_space<vmem>>, %arg2: memref<1x32xf32, #tpu.memory_space<vmem>>, %arg3: memref<1x32xf32, #tpu.memory_space<vmem>>, %arg4: memref<16x32xbf16, #tpu.memory_space<vmem>>) attributes {dimension_semantics = [#tpu.dimension_semantics<parallel>], iteration_bounds = array<i64: 1>, scalar_prefetch = 0 : i64, scratch_operands = 0 : i64, tpu.core_type = #tpu.core_type<tc>, window_params = [{transform_indices = @transform_0, window_bounds = array<i64: 16, 32>}, {pipeline_mode = #tpu.pipeline_mode<synchronous>, transform_indices = @transform_1, window_bounds = array<i64: 1, 32>}, {pipeline_mode = #tpu.pipeline_mode<synchronous>, transform_indices = @transform_2, window_bounds = array<i64: 1, 32>}, {transform_indices = @transform_3, window_bounds = array<i64: 16, 32>}]} {
    %c0 = arith.constant 0 : index
    %c0_0 = arith.constant 0 : index
    %0 = vector.load %arg1[%c0, %c0_0] : memref<16x32xf32, #tpu.memory_space<vmem>>, vector<16x32xf32>
    %cst = arith.constant dense<0.000000e+00> : vector<16xf32>
    %1 = vector.multi_reduction <add>, %0, %cst [1] : vector<16x32xf32> to vector<16xf32>
    %2 = vector.shape_cast %1 : vector<16xf32> to vector<16x1xf32>
    %cst_1 = arith.constant 3.200000e+01 : f32
    %3 = vector.broadcast %cst_1 : f32 to vector<16x1xf32>
    %4 = arith.divf %2, %3 : vector<16x1xf32>
    %5 = vector.broadcast %4 : vector<16x1xf32> to vector<16x32xf32>
    %6 = arith.subf %0, %5 : vector<16x32xf32>
    %7 = arith.mulf %6, %6 : vector<16x32xf32>
    %cst_2 = arith.constant dense<0.000000e+00> : vector<16xf32>
    %8 = vector.multi_reduction <add>, %7, %cst_2 [1] : vector<16x32xf32> to vector<16xf32>
    %9 = vector.shape_cast %8 : vector<16xf32> to vector<16x1xf32>
    %cst_3 = arith.constant 3.200000e+01 : f32
    %10 = vector.broadcast %cst_3 : f32 to vector<16x1xf32>
    %11 = arith.divf %9, %10 : vector<16x1xf32>
    %12 = vector.broadcast %4 : vector<16x1xf32> to vector<16x32xf32>
    %13 = arith.subf %0, %12 : vector<16x32xf32>
    %cst_4 = arith.constant 9.99999996E-13 : f32
    %14 = vector.broadcast %cst_4 : f32 to vector<16x1xf32>
    %15 = arith.addf %11, %14 : vector<16x1xf32>
    %16 = math.rsqrt %15 : vector<16x1xf32>
    %17 = vector.broadcast %16 : vector<16x1xf32> to vector<16x32xf32>
    %18 = arith.mulf %13, %17 : vector<16x32xf32>
    %c0_5 = arith.constant 0 : index
    %c0_6 = arith.constant 0 : index
    %19 = vector.load %arg2[%c0_5, %c0_6] : memref<1x32xf32, #tpu.memory_space<vmem>>, vector<1x32xf32>
    %20 = vector.broadcast %19 : vector<1x32xf32> to vector<16x32xf32>
    %21 = arith.mulf %18, %20 : vector<16x32xf32>
    %c0_7 = arith.constant 0 : index
    %c0_8 = arith.constant 0 : index
    %22 = vector.load %arg3[%c0_7, %c0_8] : memref<1x32xf32, #tpu.memory_space<vmem>>, vector<1x32xf32>
    %23 = vector.broadcast %22 : vector<1x32xf32> to vector<16x32xf32>
    %24 = arith.addf %21, %23 : vector<16x32xf32>
    %25 = arith.truncf %24 : vector<16x32xf32> to vector<16x32xbf16>
    %c0_9 = arith.constant 0 : index
    %c0_10 = arith.constant 0 : index
    %26 = vector.load %arg4[%c0_9, %c0_10] : memref<16x32xbf16, #tpu.memory_space<vmem>>, vector<16x32xbf16>
    tpu.vector_store %arg4[%c0_9, %c0_10], %25 {strides = array<i32>} : memref<16x32xbf16, #tpu.memory_space<vmem>>, vector<16x32xbf16>,
    return
  }
  func.func @transform_0(%arg0: i32) -> (i32, i32) {
    %c0_i32 = arith.constant 0 : i32
    %c0_i32_0 = arith.constant 0 : i32
    return %arg0, %c0_i32 : i32, i32
  }
  func.func @transform_1(%arg0: i32) -> (i32, i32) {
    %c0_i32 = arith.constant 0 : i32
    %c0_i32_0 = arith.constant 0 : i32
    %c0_i32_1 = arith.constant 0 : i32
    return %c0_i32, %c0_i32_0 : i32, i32
  }
  func.func @transform_2(%arg0: i32) -> (i32, i32) {
    %c0_i32 = arith.constant 0 : i32
    %c0_i32_0 = arith.constant 0 : i32
    %c0_i32_1 = arith.constant 0 : i32
    return %c0_i32, %c0_i32_0 : i32, i32
  }
  func.func @transform_3(%arg0: i32) -> (i32, i32) {
    %c0_i32 = arith.constant 0 : i32
    %c0_i32_0 = arith.constant 0 : i32
    return %arg0, %c0_i32 : i32, i32
  }
}

module attributes {stable_mosaic.version = 11 : i64} {
  func.func @_dense_kernel(%arg0: i32, %arg1: memref<16x32xbf16, #tpu.memory_space<vmem>>, %arg2: memref<32x96xbf16, #tpu.memory_space<vmem>>, %arg3: memref<1x96xf32, #tpu.memory_space<vmem>>, %arg4: memref<16x96xbf16, #tpu.memory_space<vmem>>) attributes {dimension_semantics = [#tpu.dimension_semantics<parallel>], iteration_bounds = array<i64: 1>, scalar_prefetch = 0 : i64, scratch_operands = 0 : i64, tpu.core_type = #tpu.core_type<tc>, window_params = [{transform_indices = @transform_0, window_bounds = array<i64: 16, 32>}, {pipeline_mode = #tpu.pipeline_mode<synchronous>, transform_indices = @transform_1, window_bounds = array<i64: 32, 96>}, {pipeline_mode = #tpu.pipeline_mode<synchronous>, transform_indices = @transform_2, window_bounds = array<i64: 1, 96>}, {transform_indices = @transform_3, window_bounds = array<i64: 16, 96>}]} {
    %c0 = arith.constant 0 : index
    %c0_0 = arith.constant 0 : index
    %0 = vector.load %arg1[%c0, %c0_0] : memref<16x32xbf16, #tpu.memory_space<vmem>>, vector<16x32xbf16>
    %c0_1 = arith.constant 0 : index
    %c0_2 = arith.constant 0 : index
    %1 = vector.load %arg2[%c0_1, %c0_2] : memref<32x96xbf16, #tpu.memory_space<vmem>>, vector<32x96xbf16>
    %cst = arith.constant dense<0.000000e+00> : vector<16x96xf32>
    %2 = tpu.matmul %0, %1, %cst {dimension_numbers = #tpu.dot_dimension_numbers<[1], [0], [0], [1], [0, 0, 1, 1], [], []>} : vector<16x32xbf16>, vector<32x96xbf16>, vector<16x96xf32> -> vector<16x96xf32>
    %c0_3 = arith.constant 0 : index
    %c0_4 = arith.constant 0 : index
    %3 = vector.load %arg3[%c0_3, %c0_4] : memref<1x96xf32, #tpu.memory_space<vmem>>, vector<1x96xf32>
    %4 = vector.broadcast %3 : vector<1x96xf32> to vector<16x96xf32>
    %5 = arith.addf %2, %4 : vector<16x96xf32>
    %6 = arith.truncf %5 : vector<16x96xf32> to vector<16x96xbf16>
    %c0_5 = arith.constant 0 : index
    %c0_6 = arith.constant 0 : index
    %7 = vector.load %arg4[%c0_5, %c0_6] : memref<16x96xbf16, #tpu.memory_space<vmem>>, vector<16x96xbf16>
    tpu.vector_store %arg4[%c0_5, %c0_6], %6 {strides = array<i32>} : memref<16x96xbf16, #tpu.memory_space<vmem>>, vector<16x96xbf16>,
    return
  }
  func.func @transform_0(%arg0: i32) -> (i32, i32) {
    %c0_i32 = arith.constant 0 : i32
    %c0_i32_0 = arith.constant 0 : i32
    return %arg0, %c0_i32 : i32, i32
  }
  func.func @transform_1(%arg0: i32) -> (i32, i32) {
    %c0_i32 = arith.constant 0 : i32
    %c0_i32_0 = arith.constant 0 : i32
    %c0_i32_1 = arith.constant 0 : i32
    return %c0_i32, %c0_i32_0 : i32, i32
  }
  func.func @transform_2(%arg0: i32) -> (i32, i32) {
    %c0_i32 = arith.constant 0 : i32
    %c0_i32_0 = arith.constant 0 : i32
    %c0_i32_1 = arith.constant 0 : i32
    return %c0_i32, %c0_i32_0 : i32, i32
  }
  func.func @transform_3(%arg0: i32) -> (i32, i32) {
    %c0_i32 = arith.constant 0 : i32
    %c0_i32_0 = arith.constant 0 : i32
    return %arg0, %c0_i32 : i32, i32
  }
}

module attributes {stable_mosaic.version = 11 : i64} {
  func.func @_dense_res_ln_kernel(%arg0: i32, %arg1: memref<16x32xbf16, #tpu.memory_space<vmem>>, %arg2: memref<32x32xbf16, #tpu.memory_space<vmem>>, %arg3: memref<1x32xf32, #tpu.memory_space<vmem>>, %arg4: memref<16x32xbf16, #tpu.memory_space<vmem>>, %arg5: memref<1x32xf32, #tpu.memory_space<vmem>>, %arg6: memref<1x32xf32, #tpu.memory_space<vmem>>, %arg7: memref<16x32xbf16, #tpu.memory_space<vmem>>) attributes {dimension_semantics = [#tpu.dimension_semantics<parallel>], iteration_bounds = array<i64: 1>, scalar_prefetch = 0 : i64, scratch_operands = 0 : i64, tpu.core_type = #tpu.core_type<tc>, window_params = [{transform_indices = @transform_0, window_bounds = array<i64: 16, 32>}, {pipeline_mode = #tpu.pipeline_mode<synchronous>, transform_indices = @transform_1, window_bounds = array<i64: 32, 32>}, {pipeline_mode = #tpu.pipeline_mode<synchronous>, transform_indices = @transform_2, window_bounds = array<i64: 1, 32>}, {transform_indices = @transform_3, window_bounds = array<i64: 16, 32>}, {pipeline_mode = #tpu.pipeline_mode<synchronous>, transform_indices = @transform_4, window_bounds = array<i64: 1, 32>}, {pipeline_mode = #tpu.pipeline_mode<synchronous>, transform_indices = @transform_5, window_bounds = array<i64: 1, 32>}, {transform_indices = @transform_6, window_bounds = array<i64: 16, 32>}]} {
    %c0 = arith.constant 0 : index
    %c0_0 = arith.constant 0 : index
    %0 = vector.load %arg1[%c0, %c0_0] : memref<16x32xbf16, #tpu.memory_space<vmem>>, vector<16x32xbf16>
    %c0_1 = arith.constant 0 : index
    %c0_2 = arith.constant 0 : index
    %1 = vector.load %arg2[%c0_1, %c0_2] : memref<32x32xbf16, #tpu.memory_space<vmem>>, vector<32x32xbf16>
    %cst = arith.constant dense<0.000000e+00> : vector<16x32xf32>
    %2 = tpu.matmul %0, %1, %cst {dimension_numbers = #tpu.dot_dimension_numbers<[1], [0], [0], [1], [0, 0, 1, 1], [], []>} : vector<16x32xbf16>, vector<32x32xbf16>, vector<16x32xf32> -> vector<16x32xf32>
    %c0_3 = arith.constant 0 : index
    %c0_4 = arith.constant 0 : index
    %3 = vector.load %arg3[%c0_3, %c0_4] : memref<1x32xf32, #tpu.memory_space<vmem>>, vector<1x32xf32>
    %4 = vector.broadcast %3 : vector<1x32xf32> to vector<16x32xf32>
    %5 = arith.addf %2, %4 : vector<16x32xf32>
    %c0_5 = arith.constant 0 : index
    %c0_6 = arith.constant 0 : index
    %6 = vector.load %arg4[%c0_5, %c0_6] : memref<16x32xbf16, #tpu.memory_space<vmem>>, vector<16x32xbf16>
    %7 = arith.extf %6 : vector<16x32xbf16> to vector<16x32xf32>
    %8 = arith.addf %5, %7 : vector<16x32xf32>
    %cst_7 = arith.constant dense<0.000000e+00> : vector<16xf32>
    %9 = vector.multi_reduction <add>, %8, %cst_7 [1] : vector<16x32xf32> to vector<16xf32>
    %10 = vector.shape_cast %9 : vector<16xf32> to vector<16x1xf32>
    %cst_8 = arith.constant 3.200000e+01 : f32
    %11 = vector.broadcast %cst_8 : f32 to vector<16x1xf32>
    %12 = arith.divf %10, %11 : vector<16x1xf32>
    %13 = vector.broadcast %12 : vector<16x1xf32> to vector<16x32xf32>
    %14 = arith.subf %8, %13 : vector<16x32xf32>
    %15 = arith.mulf %14, %14 : vector<16x32xf32>
    %cst_9 = arith.constant dense<0.000000e+00> : vector<16xf32>
    %16 = vector.multi_reduction <add>, %15, %cst_9 [1] : vector<16x32xf32> to vector<16xf32>
    %17 = vector.shape_cast %16 : vector<16xf32> to vector<16x1xf32>
    %cst_10 = arith.constant 3.200000e+01 : f32
    %18 = vector.broadcast %cst_10 : f32 to vector<16x1xf32>
    %19 = arith.divf %17, %18 : vector<16x1xf32>
    %20 = vector.broadcast %12 : vector<16x1xf32> to vector<16x32xf32>
    %21 = arith.subf %8, %20 : vector<16x32xf32>
    %cst_11 = arith.constant 9.99999996E-13 : f32
    %22 = vector.broadcast %cst_11 : f32 to vector<16x1xf32>
    %23 = arith.addf %19, %22 : vector<16x1xf32>
    %24 = math.rsqrt %23 : vector<16x1xf32>
    %25 = vector.broadcast %24 : vector<16x1xf32> to vector<16x32xf32>
    %26 = arith.mulf %21, %25 : vector<16x32xf32>
    %c0_12 = arith.constant 0 : index
    %c0_13 = arith.constant 0 : index
    %27 = vector.load %arg5[%c0_12, %c0_13] : memref<1x32xf32, #tpu.memory_space<vmem>>, vector<1x32xf32>
    %28 = vector.broadcast %27 : vector<1x32xf32> to vector<16x32xf32>
    %29 = arith.mulf %26, %28 : vector<16x32xf32>
    %c0_14 = arith.constant 0 : index
    %c0_15 = arith.constant 0 : index
    %30 = vector.load %arg6[%c0_14, %c0_15] : memref<1x32xf32, #tpu.memory_space<vmem>>, vector<1x32xf32>
    %31 = vector.broadcast %30 : vector<1x32xf32> to vector<16x32xf32>
    %32 = arith.addf %29, %31 : vector<16x32xf32>
    %33 = arith.truncf %32 : vector<16x32xf32> to vector<16x32xbf16>
    %c0_16 = arith.constant 0 : index
    %c0_17 = arith.constant 0 : index
    %34 = vector.load %arg7[%c0_16, %c0_17] : memref<16x32xbf16, #tpu.memory_space<vmem>>, vector<16x32xbf16>
    tpu.vector_store %arg7[%c0_16, %c0_17], %33 {strides = array<i32>} : memref<16x32xbf16, #tpu.memory_space<vmem>>, vector<16x32xbf16>,
    return
  }
  func.func @transform_0(%arg0: i32) -> (i32, i32) {
    %c0_i32 = arith.constant 0 : i32
    %c0_i32_0 = arith.constant 0 : i32
    return %arg0, %c0_i32 : i32, i32
  }
  func.func @transform_1(%arg0: i32) -> (i32, i32) {
    %c0_i32 = arith.constant 0 : i32
    %c0_i32_0 = arith.constant 0 : i32
    %c0_i32_1 = arith.constant 0 : i32
    return %c0_i32, %c0_i32_0 : i32, i32
  }
  func.func @transform_2(%arg0: i32) -> (i32, i32) {
    %c0_i32 = arith.constant 0 : i32
    %c0_i32_0 = arith.constant 0 : i32
    %c0_i32_1 = arith.constant 0 : i32
    return %c0_i32, %c0_i32_0 : i32, i32
  }
  func.func @transform_3(%arg0: i32) -> (i32, i32) {
    %c0_i32 = arith.constant 0 : i32
    %c0_i32_0 = arith.constant 0 : i32
    return %arg0, %c0_i32 : i32, i32
  }
  func.func @transform_4(%arg0: i32) -> (i32, i32) {
    %c0_i32 = arith.constant 0 : i32
    %c0_i32_0 = arith.constant 0 : i32
    %c0_i32_1 = arith.constant 0 : i32
    return %c0_i32, %c0_i32_0 : i32, i32
  }
  func.func @transform_5(%arg0: i32) -> (i32, i32) {
    %c0_i32 = arith.constant 0 : i32
    %c0_i32_0 = arith.constant 0 : i32
    %c0_i32_1 = arith.constant 0 : i32
    return %c0_i32, %c0_i32_0 : i32, i32
  }
  func.func @transform_6(%arg0: i32) -> (i32, i32) {
    %c0_i32 = arith.constant 0 : i32
    %c0_i32_0 = arith.constant 0 : i32
    return %arg0, %c0_i32 : i32, i32
  }
}

module attributes {stable_mosaic.version = 11 : i64} {
  func.func @_dense_res_ln_kernel(%arg0: i32, %arg1: memref<16x64xbf16, #tpu.memory_space<vmem>>, %arg2: memref<64x32xbf16, #tpu.memory_space<vmem>>, %arg3: memref<1x32xf32, #tpu.memory_space<vmem>>, %arg4: memref<16x32xbf16, #tpu.memory_space<vmem>>, %arg5: memref<1x32xf32, #tpu.memory_space<vmem>>, %arg6: memref<1x32xf32, #tpu.memory_space<vmem>>, %arg7: memref<16x32xbf16, #tpu.memory_space<vmem>>) attributes {dimension_semantics = [#tpu.dimension_semantics<parallel>], iteration_bounds = array<i64: 1>, scalar_prefetch = 0 : i64, scratch_operands = 0 : i64, tpu.core_type = #tpu.core_type<tc>, window_params = [{transform_indices = @transform_0, window_bounds = array<i64: 16, 64>}, {pipeline_mode = #tpu.pipeline_mode<synchronous>, transform_indices = @transform_1, window_bounds = array<i64: 64, 32>}, {pipeline_mode = #tpu.pipeline_mode<synchronous>, transform_indices = @transform_2, window_bounds = array<i64: 1, 32>}, {transform_indices = @transform_3, window_bounds = array<i64: 16, 32>}, {pipeline_mode = #tpu.pipeline_mode<synchronous>, transform_indices = @transform_4, window_bounds = array<i64: 1, 32>}, {pipeline_mode = #tpu.pipeline_mode<synchronous>, transform_indices = @transform_5, window_bounds = array<i64: 1, 32>}, {transform_indices = @transform_6, window_bounds = array<i64: 16, 32>}]} {
    %c0 = arith.constant 0 : index
    %c0_0 = arith.constant 0 : index
    %0 = vector.load %arg1[%c0, %c0_0] : memref<16x64xbf16, #tpu.memory_space<vmem>>, vector<16x64xbf16>
    %c0_1 = arith.constant 0 : index
    %c0_2 = arith.constant 0 : index
    %1 = vector.load %arg2[%c0_1, %c0_2] : memref<64x32xbf16, #tpu.memory_space<vmem>>, vector<64x32xbf16>
    %cst = arith.constant dense<0.000000e+00> : vector<16x32xf32>
    %2 = tpu.matmul %0, %1, %cst {dimension_numbers = #tpu.dot_dimension_numbers<[1], [0], [0], [1], [0, 0, 1, 1], [], []>} : vector<16x64xbf16>, vector<64x32xbf16>, vector<16x32xf32> -> vector<16x32xf32>
    %c0_3 = arith.constant 0 : index
    %c0_4 = arith.constant 0 : index
    %3 = vector.load %arg3[%c0_3, %c0_4] : memref<1x32xf32, #tpu.memory_space<vmem>>, vector<1x32xf32>
    %4 = vector.broadcast %3 : vector<1x32xf32> to vector<16x32xf32>
    %5 = arith.addf %2, %4 : vector<16x32xf32>
    %c0_5 = arith.constant 0 : index
    %c0_6 = arith.constant 0 : index
    %6 = vector.load %arg4[%c0_5, %c0_6] : memref<16x32xbf16, #tpu.memory_space<vmem>>, vector<16x32xbf16>
    %7 = arith.extf %6 : vector<16x32xbf16> to vector<16x32xf32>
    %8 = arith.addf %5, %7 : vector<16x32xf32>
    %cst_7 = arith.constant dense<0.000000e+00> : vector<16xf32>
    %9 = vector.multi_reduction <add>, %8, %cst_7 [1] : vector<16x32xf32> to vector<16xf32>
    %10 = vector.shape_cast %9 : vector<16xf32> to vector<16x1xf32>
    %cst_8 = arith.constant 3.200000e+01 : f32
    %11 = vector.broadcast %cst_8 : f32 to vector<16x1xf32>
    %12 = arith.divf %10, %11 : vector<16x1xf32>
    %13 = vector.broadcast %12 : vector<16x1xf32> to vector<16x32xf32>
    %14 = arith.subf %8, %13 : vector<16x32xf32>
    %15 = arith.mulf %14, %14 : vector<16x32xf32>
    %cst_9 = arith.constant dense<0.000000e+00> : vector<16xf32>
    %16 = vector.multi_reduction <add>, %15, %cst_9 [1] : vector<16x32xf32> to vector<16xf32>
    %17 = vector.shape_cast %16 : vector<16xf32> to vector<16x1xf32>
    %cst_10 = arith.constant 3.200000e+01 : f32
    %18 = vector.broadcast %cst_10 : f32 to vector<16x1xf32>
    %19 = arith.divf %17, %18 : vector<16x1xf32>
    %20 = vector.broadcast %12 : vector<16x1xf32> to vector<16x32xf32>
    %21 = arith.subf %8, %20 : vector<16x32xf32>
    %cst_11 = arith.constant 9.99999996E-13 : f32
    %22 = vector.broadcast %cst_11 : f32 to vector<16x1xf32>
    %23 = arith.addf %19, %22 : vector<16x1xf32>
    %24 = math.rsqrt %23 : vector<16x1xf32>
    %25 = vector.broadcast %24 : vector<16x1xf32> to vector<16x32xf32>
    %26 = arith.mulf %21, %25 : vector<16x32xf32>
    %c0_12 = arith.constant 0 : index
    %c0_13 = arith.constant 0 : index
    %27 = vector.load %arg5[%c0_12, %c0_13] : memref<1x32xf32, #tpu.memory_space<vmem>>, vector<1x32xf32>
    %28 = vector.broadcast %27 : vector<1x32xf32> to vector<16x32xf32>
    %29 = arith.mulf %26, %28 : vector<16x32xf32>
    %c0_14 = arith.constant 0 : index
    %c0_15 = arith.constant 0 : index
    %30 = vector.load %arg6[%c0_14, %c0_15] : memref<1x32xf32, #tpu.memory_space<vmem>>, vector<1x32xf32>
    %31 = vector.broadcast %30 : vector<1x32xf32> to vector<16x32xf32>
    %32 = arith.addf %29, %31 : vector<16x32xf32>
    %33 = arith.truncf %32 : vector<16x32xf32> to vector<16x32xbf16>
    %c0_16 = arith.constant 0 : index
    %c0_17 = arith.constant 0 : index
    %34 = vector.load %arg7[%c0_16, %c0_17] : memref<16x32xbf16, #tpu.memory_space<vmem>>, vector<16x32xbf16>
    tpu.vector_store %arg7[%c0_16, %c0_17], %33 {strides = array<i32>} : memref<16x32xbf16, #tpu.memory_space<vmem>>, vector<16x32xbf16>,
    return
  }
  func.func @transform_0(%arg0: i32) -> (i32, i32) {
    %c0_i32 = arith.constant 0 : i32
    %c0_i32_0 = arith.constant 0 : i32
    return %arg0, %c0_i32 : i32, i32
  }
  func.func @transform_1(%arg0: i32) -> (i32, i32) {
    %c0_i32 = arith.constant 0 : i32
    %c0_i32_0 = arith.constant 0 : i32
    %c0_i32_1 = arith.constant 0 : i32
    return %c0_i32, %c0_i32_0 : i32, i32
  }
  func.func @transform_2(%arg0: i32) -> (i32, i32) {
    %c0_i32 = arith.constant 0 : i32
    %c0_i32_0 = arith.constant 0 : i32
    %c0_i32_1 = arith.constant 0 : i32
    return %c0_i32, %c0_i32_0 : i32, i32
  }
  func.func @transform_3(%arg0: i32) -> (i32, i32) {
    %c0_i32 = arith.constant 0 : i32
    %c0_i32_0 = arith.constant 0 : i32
    return %arg0, %c0_i32 : i32, i32
  }
  func.func @transform_4(%arg0: i32) -> (i32, i32) {
    %c0_i32 = arith.constant 0 : i32
    %c0_i32_0 = arith.constant 0 : i32
    %c0_i32_1 = arith.constant 0 : i32
    return %c0_i32, %c0_i32_0 : i32, i32
  }
  func.func @transform_5(%arg0: i32) -> (i32, i32) {
    %c0_i32 = arith.constant 0 : i32
    %c0_i32_0 = arith.constant 0 : i32
    %c0_i32_1 = arith.constant 0 : i32
    return %c0_i32, %c0_i32_0 : i32, i32
  }
  func.func @transform_6(%arg0: i32) -> (i32, i32) {
    %c0_i32 = arith.constant 0 : i32
    %c0_i32_0 = arith.constant 0 : i32
    return %arg0, %c0_i32 : i32, i32
  }
}

module attributes {stable_mosaic.version = 11 : i64} {
  func.func @_dense_kernel(%arg0: i32, %arg1: memref<16x32xbf16, #tpu.memory_space<vmem>>, %arg2: memref<32x64xbf16, #tpu.memory_space<vmem>>, %arg3: memref<1x64xf32, #tpu.memory_space<vmem>>, %arg4: memref<16x64xbf16, #tpu.memory_space<vmem>>) attributes {dimension_semantics = [#tpu.dimension_semantics<parallel>], iteration_bounds = array<i64: 1>, scalar_prefetch = 0 : i64, scratch_operands = 0 : i64, tpu.core_type = #tpu.core_type<tc>, window_params = [{transform_indices = @transform_0, window_bounds = array<i64: 16, 32>}, {pipeline_mode = #tpu.pipeline_mode<synchronous>, transform_indices = @transform_1, window_bounds = array<i64: 32, 64>}, {pipeline_mode = #tpu.pipeline_mode<synchronous>, transform_indices = @transform_2, window_bounds = array<i64: 1, 64>}, {transform_indices = @transform_3, window_bounds = array<i64: 16, 64>}]} {
    %c0 = arith.constant 0 : index
    %c0_0 = arith.constant 0 : index
    %0 = vector.load %arg1[%c0, %c0_0] : memref<16x32xbf16, #tpu.memory_space<vmem>>, vector<16x32xbf16>
    %c0_1 = arith.constant 0 : index
    %c0_2 = arith.constant 0 : index
    %1 = vector.load %arg2[%c0_1, %c0_2] : memref<32x64xbf16, #tpu.memory_space<vmem>>, vector<32x64xbf16>
    %cst = arith.constant dense<0.000000e+00> : vector<16x64xf32>
    %2 = tpu.matmul %0, %1, %cst {dimension_numbers = #tpu.dot_dimension_numbers<[1], [0], [0], [1], [0, 0, 1, 1], [], []>} : vector<16x32xbf16>, vector<32x64xbf16>, vector<16x64xf32> -> vector<16x64xf32>
    %c0_3 = arith.constant 0 : index
    %c0_4 = arith.constant 0 : index
    %3 = vector.load %arg3[%c0_3, %c0_4] : memref<1x64xf32, #tpu.memory_space<vmem>>, vector<1x64xf32>
    %4 = vector.broadcast %3 : vector<1x64xf32> to vector<16x64xf32>
    %5 = arith.addf %2, %4 : vector<16x64xf32>
    %6 = arith.mulf %5, %5 : vector<16x64xf32>
    %7 = arith.mulf %5, %6 : vector<16x64xf32>
    %cst_5 = arith.constant 4.471500e-02 : f32
    %8 = vector.broadcast %cst_5 : f32 to vector<16x64xf32>
    %9 = arith.mulf %8, %7 : vector<16x64xf32>
    %10 = arith.addf %5, %9 : vector<16x64xf32>
    %cst_6 = arith.constant 0.797884583 : f32
    %11 = vector.broadcast %cst_6 : f32 to vector<16x64xf32>
    %12 = arith.mulf %11, %10 : vector<16x64xf32>
    %13 = math.tanh %12 : vector<16x64xf32>
    %cst_7 = arith.constant 1.000000e+00 : f32
    %14 = vector.broadcast %cst_7 : f32 to vector<16x64xf32>
    %15 = arith.addf %14, %13 : vector<16x64xf32>
    %cst_8 = arith.constant 5.000000e-01 : f32
    %16 = vector.broadcast %cst_8 : f32 to vector<16x64xf32>
    %17 = arith.mulf %16, %15 : vector<16x64xf32>
    %18 = arith.mulf %5, %17 : vector<16x64xf32>
    %19 = arith.truncf %18 : vector<16x64xf32> to vector<16x64xbf16>
    %c0_9 = arith.constant 0 : index
    %c0_10 = arith.constant 0 : index
    %20 = vector.load %arg4[%c0_9, %c0_10] : memref<16x64xbf16, #tpu.memory_space<vmem>>, vector<16x64xbf16>
    tpu.vector_store %arg4[%c0_9, %c0_10], %19 {strides = array<i32>} : memref<16x64xbf16, #tpu.memory_space<vmem>>, vector<16x64xbf16>,
    return
  }
  func.func @transform_0(%arg0: i32) -> (i32, i32) {
    %c0_i32 = arith.constant 0 : i32
    %c0_i32_0 = arith.constant 0 : i32
    return %arg0, %c0_i32 : i32, i32
  }
  func.func @transform_1(%arg0: i32) -> (i32, i32) {
    %c0_i32 = arith.constant 0 : i32
    %c0_i32_0 = arith.constant 0 : i32
    %c0_i32_1 = arith.constant 0 : i32
    return %c0_i32, %c0_i32_0 : i32, i32
  }
  func.func @transform_2(%arg0: i32) -> (i32, i32) {
    %c0_i32 = arith.constant 0 : i32
    %c0_i32_0 = arith.constant 0 : i32
    %c0_i32_1 = arith.constant 0 : i32
    return %c0_i32, %c0_i32_0 : i32, i32
  }
  func.func @transform_3(%arg0: i32) -> (i32, i32) {
    %c0_i32 = arith.constant 0 : i32
    %c0_i32_0 = arith.constant 0 : i32
    return %arg0, %c0_i32 : i32, i32
  }
}

</mosaic_0001>

<llo_original>
// kernel: bert_classifier_forward.11
$region0: #{bert_classifier_forward.11}
  #allocation0 [shape = 'u32[]', space=smem, size = 0x4, offset = 0x4, fixed_abs, tag = 'smem constant byte address 0x4 - core index']
  #allocation1 [shape = 'u32[72,128]{1,0:T(1,128)}', space=vmem, size = 0x9000, scoped, tag = 'internal scratch']
  %s0 = inlined_call_operand.vmem [shape: f32[16,32], index: 0, kind: input, shape index: {}]
  %s1 = inlined_call_operand.vmem [shape: f32[1,32], index: 1, kind: input, shape index: {}]
  %s2 = inlined_call_operand.vmem [shape: f32[1,32], index: 2, kind: input, shape index: {}]
  %s3 = inlined_call_operand.vmem [shape: bf16[16,32], index: 3, kind: output, shape index: {}]
  %s4 = sld [smem:[#allocation0]]
  $region22: #{bert_classifier_forward.11} parent=0
    _
  %s6 = ssub.s32 1, %s4
  %s7 = scalar_select 0, %s6, %s4
  // Predicated region
  $region2: #{bert_classifier_forward.11} parent=0 // pred_check
    _
  $region3: #{bert_classifier_forward.11} parent=0 // pred_check_branch
    %9 = sbr.rel (0) target = $region5
  $region4: #{bert_classifier_forward.11} parent=0 // pred_region
    _
  $region5: #{bert_classifier_forward.11} parent=0 // pred_fallthru
    _
  // Predicated region
  $region6: #{bert_classifier_forward.11} parent=0 // pred_check
    _
  $region7: #{bert_classifier_forward.11} parent=0 // pred_check_branch
    %11 = sbr.rel (0) target = $region9
  $region8: #{bert_classifier_forward.11} parent=0 // pred_region
    _
  $region9: #{bert_classifier_forward.11} parent=0 // pred_fallthru
    _
  // Predicated region
  $region10: #{bert_classifier_forward.11} parent=0 // pred_check
    _
  $region11: #{bert_classifier_forward.11} parent=0 // pred_check_branch
    %13 = sbr.rel (0) target = $region13
  $region12: #{bert_classifier_forward.11} parent=0 // pred_region
    _
  $region13: #{bert_classifier_forward.11} parent=0 // pred_fallthru
    _
  %v14 = vld [vmem:[%s0] sm:$0xff]
  %v15 = vld [vmem:[%s0 + $0x8] sm:$0xff]
  %vm16 = vcmask 261120
  %v17 = vsel %vm16, %v14, 0.0
  %18 = vadd.xlane.f32.xlu0 %v17
  %v19 = vpop.xlane.xlu0 %18
  %v20 = vsel %vm16, %v15, 0.0
  %21 = vadd.xlane.f32.xlu0 %v20
  %v22 = vpop.xlane.xlu0 %21
  %v23 = vrcp.pop 32.0
  %v24 = vmul.f32 32.0, %v23
  %v25 = vsub.f32 1.0, %v24
  %v26 = vmul.f32 %v23, %v25
  %v27 = vadd.f32 %v23, %v26
  %vm28 = vweird.f32 %v23
  %v29 = vsel %vm28, %v23, %v27
  %v30 = vmul.f32 %v19, %v29
  %v31 = vmul.f32 %v22, %v29
  %v32 = vsub.f32 %v14, %v30
  %v33 = vsub.f32 %v15, %v31
  %v34 = vmul.f32 %v32, %v32
  %v35 = vmul.f32 %v33, %v33
  %v36 = vsel %vm16, %v34, 0.0
  %37 = vadd.xlane.f32.xlu0 %v36
  %v38 = vpop.xlane.xlu0 %37
  %v39 = vsel %vm16, %v35, 0.0
  %40 = vadd.xlane.f32.xlu0 %v39
  %v41 = vpop.xlane.xlu0 %40
  %v42 = vmul.f32 %v38, %v29
  %v43 = vmul.f32 %v41, %v29
  %v44 = vadd.f32 %v42, 1e-12
  %v45 = vadd.f32 %v43, 1e-12
  %v46 = vrsqrt.pop %v44
  %v47 = vmul.f32 %v46, %v44
  %v48 = vmul.f32 %v47, %v46
  %v49 = vmul.f32 0.5, %v48
  %v50 = vsub.f32 1.5, %v49
  %v51 = vmul.f32 %v46, %v50
  %vm52 = vweird.f32 %v44
  %vm53 = vweird.f32 %v46
  %vm54 = vmor %vm52, %vm53
  %v55 = vsel %vm54, %v46, %v51
  %v56 = vrsqrt.pop %v45
  %v57 = vmul.f32 %v56, %v45
  %v58 = vmul.f32 %v57, %v56
  %v59 = vmul.f32 0.5, %v58
  %v60 = vsub.f32 1.5, %v59
  %v61 = vmul.f32 %v56, %v60
  %vm62 = vweird.f32 %v45
  %vm63 = vweird.f32 %v56
  %vm64 = vmor %vm62, %vm63
  %v65 = vsel %vm64, %v56, %v61
  %v66 = vmul.f32 %v32, %v55
  %v67 = vmul.f32 %v33, %v65
  %v68 = vld [vmem:[%s1] sm:$0x1]
  %v70 = vperm.slane %v68, 0
  %v72 = vmul.f32 %v66, %v70
  %v73 = vmul.f32 %v67, %v70
  %v74 = vld [vmem:[%s2] sm:$0x1]
  %v76 = vperm.slane %v74, 0
  %v78 = vadd.f32 %v72, %v76
  %v79 = vadd.f32 %v73, %v76
  %v80 = vpack.c.bf16 %v78, %v78
  %v81 = vpack.c.bf16 %v79, %v79
  %vm82 = vcmask 257024
  %83 = vst.msk [vmem:[%s3] sm:$0xf] %vm82, %v80
  %84 = vst.msk [vmem:[%s3 + $0x4] sm:$0xf] %vm82, %v81
  // Predicated region
  $region14: #{bert_classifier_forward.11} parent=0 // pred_check
    _
  $region15: #{bert_classifier_forward.11} parent=0 // pred_check_branch
    %86 = sbr.rel (0) target = $region17
  $region16: #{bert_classifier_forward.11} parent=0 // pred_region
    _
  $region17: #{bert_classifier_forward.11} parent=0 // pred_fallthru
    _
  // Predicated region
  $region18: #{bert_classifier_forward.11} parent=0 // pred_check
    _
  $region19: #{bert_classifier_forward.11} parent=0 // pred_check_branch
    %88 = sbr.rel (0) target = $region21
  $region20: #{bert_classifier_forward.11} parent=0 // pred_region
    _
  $region21: #{bert_classifier_forward.11} parent=0 // pred_fallthru
    _

// kernel: bert_classifier_forward.13
$region0: #{bert_classifier_forward.13}
  #allocation0 [shape = 'u32[]', space=smem, size = 0x4, offset = 0x4, fixed_abs, tag = 'smem constant byte address 0x4 - core index']
  #allocation1 [shape = 'u32[72,128]{1,0:T(1,128)}', space=vmem, size = 0x9000, scoped, tag = 'internal scratch']
  %s0 = inlined_call_operand.vmem [shape: bf16[2,4,8,8], index: 0, kind: input, shape index: {}]
  %s1 = inlined_call_operand.vmem [shape: bf16[2,4,8,8], index: 1, kind: input, shape index: {}]
  %s2 = inlined_call_operand.vmem [shape: bf16[2,4,8,8], index: 2, kind: input, shape index: {}]
  %s3 = inlined_call_operand.vmem [shape: f32[2,1,1,8], index: 3, kind: input, shape index: {}]
  %s4 = inlined_call_operand.vmem [shape: bf16[2,4,8,8], index: 4, kind: output, shape index: {}]
  %s5 = sld [smem:[#allocation0]]
  $region49: #{bert_classifier_forward.13} parent=0
    _
  %s7 = ssub.s32 1, %s5
  %s8 = scalar_select 0, %s7, %s5
  loop: start=0, step=1, limit=10
  $region2: #{bert_classifier_forward.13} parent=0 // loop_pre_header
    _
  $region3: #{bert_classifier_forward.13} parent=0 // loop_header
    %s10 = sphi 0, %s14
    %p11 = scmp.ge.s32.totalorder %s10, 10
    %s17 = sphi 0, %s29
    %s18 = sphi 0, %s25
    %s19 = sphi 0, %s17
    %s20 = sphi 0, %s18
    %s21 = sphi 0, %s19
    %s22 = sphi 0, %s20
    %s34 = sphi 0, %s36
    %s37 = sphi 0, %s34
    %s38 = sphi 0, %s37
    %s54 = sphi 0, %s38
    %s62 = sphi 0, %s64
    %s65 = sphi 0, %s62
    %s66 = sphi 0, %s65
    %s82 = sphi 0, %s66
    %s90 = sphi 0, %s92
    %s93 = sphi 0, %s90
    %s94 = sphi 0, %s93
    %s110 = sphi 0, %s94
    %s116 = sphi 0, %s118
    %s119 = sphi 0, %s116
    %s120 = sphi 0, %s119
    %s136 = sphi 0, %s120
    %s144 = sphi 0, %s146
    %s147 = sphi 0, %s144
    %s148 = sphi 0, %s147
    %s164 = sphi 0, %s148
  $region4: #{bert_classifier_forward.13} parent=0 // loop_header_branch
    %13 = sbr.rel (%p11) target = $region8
  $region5: #{bert_classifier_forward.13} parent=0 // loop_body
    %s15 = ssub.s32 %s10, 1
    %s16 = ssub.s32 %s10, 2
    %s23 = sadd.s32 1, %s18
    %p24 = scmp.ge.s32.totalorder %s23, 4
    %s25 = scalar_select %p24, 0, %s23
    %s26 = sadd.s32 1, %s17
    %s27 = scalar_select %p24, %s26, %s17
    %p28 = scmp.ge.s32.totalorder %s27, 2
    %s29 = scalar_select %p28, 0, %s27
    %s30 = ssub.s32 %s17, %s29
    %s31 = ssub.s32 %s18, %s25
    %s32 = sor.u32 %s30, %s31
    %p33 = scmp.eq.s32.totalorder %s32, 0
    %s35 = sadd.s32 %s34, 1
    %s36 = scalar_select %p33, %s34, %s35
    %p39 = pneg %p33
    %p40 = scmp.eq.s32.totalorder %s10, 7
    %p41 = por %p39, %p40
    %p42 = scmp.ne.s32.totalorder %s34, %s37
    %p43 = scmp.eq.s32.totalorder %s10, 0
    %p44 = por %p42, %p43
    %p45 = scmp.ne.s32.totalorder %s34, %s37
    %p46 = scmp.eq.s32.totalorder %s15, 7
    %p47 = por %p45, %p46
    %p48 = scmp.ne.s32.totalorder %s37, %s38
    %p49 = scmp.eq.s32.totalorder %s15, 0
    %p50 = por %p48, %p49
    %p51 = scmp.ne.s32.totalorder %s37, %s38
    %p52 = scmp.eq.s32.totalorder %s16, 7
    %p53 = por %p51, %p52
    %p55 = scmp.ne.s32.totalorder %s38, %s54
    %p56 = scmp.eq.s32.totalorder %s16, 0
    %p57 = por %p55, %p56
    %s58 = ssub.s32 %s17, %s29
    %s59 = ssub.s32 %s18, %s25
    %s60 = sor.u32 %s58, %s59
    %p61 = scmp.eq.s32.totalorder %s60, 0
    %s63 = sadd.s32 %s62, 1
    %s64 = scalar_select %p61, %s62, %s63
    %p67 = pneg %p61
    %p68 = scmp.eq.s32.totalorder %s10, 7
    %p69 = por %p67, %p68
    %p70 = scmp.ne.s32.totalorder %s62, %s65
    %p71 = scmp.eq.s32.totalorder %s10, 0
    %p72 = por %p70, %p71
    %p73 = scmp.ne.s32.totalorder %s62, %s65
    %p74 = scmp.eq.s32.totalorder %s15, 7
    %p75 = por %p73, %p74
    %p76 = scmp.ne.s32.totalorder %s65, %s66
    %p77 = scmp.eq.s32.totalorder %s15, 0
    %p78 = por %p76, %p77
    %p79 = scmp.ne.s32.totalorder %s65, %s66
    %p80 = scmp.eq.s32.totalorder %s16, 7
    %p81 = por %p79, %p80
    %p83 = scmp.ne.s32.totalorder %s66, %s82
    %p84 = scmp.eq.s32.totalorder %s16, 0
    %p85 = por %p83, %p84
    %s86 = ssub.s32 %s17, %s29
    %s87 = ssub.s32 %s18, %s25
    %s88 = sor.u32 %s86, %s87
    %p89 = scmp.eq.s32.totalorder %s88, 0
    %s91 = sadd.s32 %s90, 1
    %s92 = scalar_select %p89, %s90, %s91
    %p95 = pneg %p89
    %p96 = scmp.eq.s32.totalorder %s10, 7
    %p97 = por %p95, %p96
    %p98 = scmp.ne.s32.totalorder %s90, %s93
    %p99 = scmp.eq.s32.totalorder %s10, 0
    %p100 = por %p98, %p99
    %p101 = scmp.ne.s32.totalorder %s90, %s93
    %p102 = scmp.eq.s32.totalorder %s15, 7
    %p103 = por %p101, %p102
    %p104 = scmp.ne.s32.totalorder %s93, %s94
    %p105 = scmp.eq.s32.totalorder %s15, 0
    %p106 = por %p104, %p105
    %p107 = scmp.ne.s32.totalorder %s93, %s94
    %p108 = scmp.eq.s32.totalorder %s16, 7
    %p109 = por %p107, %p108
    %p111 = scmp.ne.s32.totalorder %s94, %s110
    %p112 = scmp.eq.s32.totalorder %s16, 0
    %p113 = por %p111, %p112
    %s114 = ssub.s32 %s17, %s29
    %p115 = scmp.eq.s32.totalorder %s114, 0
    %s117 = sadd.s32 %s116, 1
    %s118 = scalar_select %p115, %s116, %s117
    %p121 = pneg %p115
    %p122 = scmp.eq.s32.totalorder %s10, 7
    %p123 = por %p121, %p122
    %p124 = scmp.ne.s32.totalorder %s116, %s119
    %p125 = scmp.eq.s32.totalorder %s10, 0
    %p126 = por %p124, %p125
    %p127 = scmp.ne.s32.totalorder %s116, %s119
    %p128 = scmp.eq.s32.totalorder %s15, 7
    %p129 = por %p127, %p128
    %p130 = scmp.ne.s32.totalorder %s119, %s120
    %p131 = scmp.eq.s32.totalorder %s15, 0
    %p132 = por %p130, %p131
    %p133 = scmp.ne.s32.totalorder %s119, %s120
    %p134 = scmp.eq.s32.totalorder %s16, 7
    %p135 = por %p133, %p134
    %p137 = scmp.ne.s32.totalorder %s120, %s136
    %p138 = scmp.eq.s32.totalorder %s16, 0
    %p139 = por %p137, %p138
    %s140 = ssub.s32 %s17, %s29
    %s141 = ssub.s32 %s18, %s25
    %s142 = sor.u32 %s140, %s141
    %p143 = scmp.eq.s32.totalorder %s142, 0
    %s145 = sadd.s32 %s144, 1
    %s146 = scalar_select %p143, %s144, %s145
    %p149 = pneg %p143
    %p150 = scmp.eq.s32.totalorder %s10, 7
    %p151 = por %p149, %p150
    %p152 = scmp.ne.s32.totalorder %s144, %s147
    %p153 = scmp.eq.s32.totalorder %s10, 0
    %p154 = por %p152, %p153
    %p155 = scmp.ne.s32.totalorder %s144, %s147
    %p156 = scmp.eq.s32.totalorder %s15, 7
    %p157 = por %p155, %p156
    %p158 = scmp.ne.s32.totalorder %s147, %s148
    %p159 = scmp.eq.s32.totalorder %s15, 0
    %p160 = por %p158, %p159
    %p161 = scmp.ne.s32.totalorder %s147, %s148
    %p162 = scmp.eq.s32.totalorder %s16, 7
    %p163 = por %p161, %p162
    %p165 = scmp.ne.s32.totalorder %s148, %s164
    %p166 = scmp.eq.s32.totalorder %s16, 0
    %p167 = por %p165, %p166
    %p168 = scmp.le.s32.totalorder 1, %s10
    %p169 = scmp.lt.s32.totalorder %s10, 9
    %p170 = pnand %p168, %p169
    %p171 = pneg %p170
    // Predicated region
    $region9: #{bert_classifier_forward.13} parent=5 // pred_check
      _
    $region10: #{bert_classifier_forward.13} parent=5 // pred_check_branch
      %173 = sbr.rel (%p170) target = $region12
    $region11: #{bert_classifier_forward.13} parent=5 // pred_region
      %s174 = ssub.s32 %s10, 1
    $region12: #{bert_classifier_forward.13} parent=5 // pred_fallthru
      _
    %p175 = scmp.lt.s32.totalorder %s10, 8
    // Predicated region
    $region13: #{bert_classifier_forward.13} parent=5 // pred_check
      %p176 = pneg %p175
    $region14: #{bert_classifier_forward.13} parent=5 // pred_check_branch
      %178 = sbr.rel (%p176) target = $region16
    $region15: #{bert_classifier_forward.13} parent=5 // pred_region
      // Predicated region
      $region17: #{bert_classifier_forward.13} parent=15 // pred_check
        %p179 = pneg %p44
      $region18: #{bert_classifier_forward.13} parent=15 // pred_check_branch
        %181 = sbr.rel (%p179) target = $region20
      $region19: #{bert_classifier_forward.13} parent=15 // pred_region
        %p182 = scmp.lt.s32.totalorder %s17, 1
        %s183 = scalar_select %p182, %s17, 1
        %p184 = scmp.lt.s32.totalorder %s18, 3
        %s185 = scalar_select %p184, %s18, 3
        %s186 = smul.addr %s183, 4
        %s187 = sadd.s32 %s185, %s186
        %s188 = smul.addr %s187, 4
        %s189 = scalar_lea.vmem %s0, %s188
      $region20: #{bert_classifier_forward.13} parent=15 // pred_fallthru
        _
      // Predicated region
      $region21: #{bert_classifier_forward.13} parent=15 // pred_check
        %p190 = pneg %p72
      $region22: #{bert_classifier_forward.13} parent=15 // pred_check_branch
        %192 = sbr.rel (%p190) target = $region24
      $region23: #{bert_classifier_forward.13} parent=15 // pred_region
        %p193 = scmp.lt.s32.totalorder %s17, 1
        %s194 = scalar_select %p193, %s17, 1
        %p195 = scmp.lt.s32.totalorder %s18, 3
        %s196 = scalar_select %p195, %s18, 3
        %s197 = smul.addr %s194, 4
        %s198 = sadd.s32 %s196, %s197
        %s199 = smul.addr %s198, 4
        %s200 = scalar_lea.vmem %s1, %s199
      $region24: #{bert_classifier_forward.13} parent=15 // pred_fallthru
        _
      // Predicated region
      $region25: #{bert_classifier_forward.13} parent=15 // pred_check
        %p201 = pneg %p100
      $region26: #{bert_classifier_forward.13} parent=15 // pred_check_branch
        %203 = sbr.rel (%p201) target = $region28
      $region27: #{bert_classifier_forward.13} parent=15 // pred_region
        %p204 = scmp.lt.s32.totalorder %s17, 1
        %s205 = scalar_select %p204, %s17, 1
        %p206 = scmp.lt.s32.totalorder %s18, 3
        %s207 = scalar_select %p206, %s18, 3
        %s208 = smul.addr %s205, 4
        %s209 = sadd.s32 %s207, %s208
        %s210 = smul.addr %s209, 4
        %s211 = scalar_lea.vmem %s2, %s210
      $region28: #{bert_classifier_forward.13} parent=15 // pred_fallthru
        _
      // Predicated region
      $region29: #{bert_classifier_forward.13} parent=15 // pred_check
        %p212 = pneg %p126
      $region30: #{bert_classifier_forward.13} parent=15 // pred_check_branch
        %214 = sbr.rel (%p212) target = $region32
      $region31: #{bert_classifier_forward.13} parent=15 // pred_region
        %p215 = scmp.lt.s32.totalorder %s17, 1
        %s216 = scalar_select %p215, %s17, 1
        %s217 = scalar_lea.vmem %s3, %s216
      $region32: #{bert_classifier_forward.13} parent=15 // pred_fallthru
        _
    $region16: #{bert_classifier_forward.13} parent=5 // pred_fallthru
      _
    %p218 = scmp.le.s32.totalorder 1, %s10
    %p219 = scmp.lt.s32.totalorder %s10, 9
    %p220 = pnand %p218, %p219
    %p221 = pneg %p220
    // Predicated region
    $region33: #{bert_classifier_forward.13} parent=5 // pred_check
      _
    $region34: #{bert_classifier_forward.13} parent=5 // pred_check_branch
      %223 = sbr.rel (%p220) target = $region36
    $region35: #{bert_classifier_forward.13} parent=5 // pred_region
      %s224 = ssub.s32 %s10, 1
      %p225 = scmp.lt.s32.totalorder %s19, 1
      %s226 = scalar_select %p225, %s19, 1
      %p227 = scmp.lt.s32.totalorder %s20, 3
      %s228 = scalar_select %p227, %s20, 3
      %s229 = smul.addr %s226, 4
      %s230 = sadd.s32 %s228, %s229
      %s231 = smul.addr %s230, 4
      %s232 = scalar_lea.vmem %s0, %s231
      %p233 = pneg %p50
      %p234 = pneg %p47
      %p235 = scmp.lt.s32.totalorder %s19, 1
      %s236 = scalar_select %p235, %s19, 1
      %p237 = scmp.lt.s32.totalorder %s20, 3
      %s238 = scalar_select %p237, %s20, 3
      %s239 = smul.addr %s236, 4
      %s240 = sadd.s32 %s238, %s239
      %s241 = smul.addr %s240, 4
      %s242 = scalar_lea.vmem %s1, %s241
      %p243 = pneg %p78
      %p244 = pneg %p75
      %p245 = scmp.lt.s32.totalorder %s19, 1
      %s246 = scalar_select %p245, %s19, 1
      %p247 = scmp.lt.s32.totalorder %s20, 3
      %s248 = scalar_select %p247, %s20, 3
      %s249 = smul.addr %s246, 4
      %s250 = sadd.s32 %s248, %s249
      %s251 = smul.addr %s250, 4
      %s252 = scalar_lea.vmem %s2, %s251
      %p253 = pneg %p106
      %p254 = pneg %p103
      %p255 = scmp.lt.s32.totalorder %s19, 1
      %s256 = scalar_select %p255, %s19, 1
      %s257 = scalar_lea.vmem %s3, %s256
      %p258 = pneg %p132
      %p259 = pneg %p129
      %p260 = pneg %p160
      %p261 = pneg %p157
      %p262 = scmp.lt.s32.totalorder %s19, 1
      %s263 = scalar_select %p262, %s19, 1
      %p264 = scmp.lt.s32.totalorder %s20, 3
      %s265 = scalar_select %p264, %s20, 3
      %s266 = smul.addr %s263, 4
      %s267 = sadd.s32 %s265, %s266
      %s268 = smul.addr %s267, 4
      %s269 = scalar_lea.vmem %s4, %s268
      %p270 = scmp.lt.s32.totalorder %s19, 1
      %s271 = scalar_select %p270, %s19, 1
      %p272 = scmp.lt.s32.totalorder %s20, 3
      %s273 = scalar_select %p272, %s20, 3
      %s274 = smul.addr %s271, 4
      %s275 = sadd.s32 %s273, %s274
      %s276 = smul.addr %s275, 4
      %s277 = scalar_lea.vmem %s0, %s276
      %p278 = scmp.lt.s32.totalorder %s19, 1
      %s279 = scalar_select %p278, %s19, 1
      %p280 = scmp.lt.s32.totalorder %s20, 3
      %s281 = scalar_select %p280, %s20, 3
      %s282 = smul.addr %s279, 4
      %s283 = sadd.s32 %s281, %s282
      %s284 = smul.addr %s283, 4
      %s285 = scalar_lea.vmem %s1, %s284
      %p286 = scmp.lt.s32.totalorder %s19, 1
      %s287 = scalar_select %p286, %s19, 1
      %p288 = scmp.lt.s32.totalorder %s20, 3
      %s289 = scalar_select %p288, %s20, 3
      %s290 = smul.addr %s287, 4
      %s291 = sadd.s32 %s289, %s290
      %s292 = smul.addr %s291, 4
      %s293 = scalar_lea.vmem %s2, %s292
      %p294 = scmp.lt.s32.totalorder %s19, 1
      %s295 = scalar_select %p294, %s19, 1
      %s296 = scalar_lea.vmem %s3, %s295
      %p297 = scmp.lt.s32.totalorder %s19, 1
      %s298 = scalar_select %p297, %s19, 1
      %p299 = scmp.lt.s32.totalorder %s20, 3
      %s300 = scalar_select %p299, %s20, 3
      %s301 = smul.addr %s298, 4
      %s302 = sadd.s32 %s300, %s301
      %s303 = smul.addr %s302, 4
      %s304 = scalar_lea.vmem %s4, %s303
      %v306 = vld [vmem:[%s277] sm:$0xf]
      %v307 = vld [vmem:[%s285] sm:$0xf]
      %v308 = vld [vmem:[%s293] sm:$0xf]
      %v309 = vld [vmem:[%s296] sm:$0x1]
      %vm310 = vcmask 64512
      %v312 = vsel %vm310, %v306, 0
      %v315 = vsel %vm310, %v307, 0
      %317 = vmatpush.bf16.xpose.msra.mxu0 0
      %318 = vmatpush.bf16.xpose.msra.mxu0 0
      %319 = vmatpush.bf16.xpose.msra.mxu0 0
      %320 = vmatpush.bf16.xpose.msra.mxu0 0
      %321 = vmatpush.bf16.xpose.msra.mxu0 0
      %322 = vmatpush.bf16.xpose.msra.mxu0 0
      %323 = vmatpush.bf16.xpose.msra.mxu0 0
      %324 = vmatpush.bf16.xpose.msra.mxu0 %v315
      %325 = vmatmul.bf16.gmra.mxu0 %v312
      %v326 = vpop.f32.mrf.mxu0
      %v327 = vadd.f32 0.0, %v326
      %v328 = vpop.f32.mrf.mxu0
      %329 = vdwg.mxu0
      %v330 = vmul.f32 %v327, 0.35355338
      %v332 = vperm.slane %v309, 0
      %v334 = vadd.f32 %v330, %v332
      %v335 = vsel %vm310, %v334, -inf
      %336 = vmax.xlane.f32.xlu0 %v335
      %v337 = vpop.xlane.xlu0 %336
      %v338 = vsub.f32 %v334, %v337
      %v339 = vmul.f32 %v338, 1.442695
      %v340 = vpow.pop %v339
      %v341 = vsel %vm310, %v340, 0.0
      %342 = vadd.xlane.f32.xlu0 %v341
      %v343 = vpop.xlane.xlu0 %342
      %v344 = vrcp.pop %v343
      %v345 = vmul.f32 %v340, %v344
      %v346 = vpack.c.bf16 %v345, %v345
      %v348 = vsel %vm310, %v346, 0
      %vm350 = vcmask 1043456
      %v352 = vsel %vm350, %v308, 0
      %354 = vmatpush.bf16.msra.mxu0 0
      %355 = vmatpush.bf16.msra.mxu0 0
      %356 = vmatpush.bf16.msra.mxu0 0
      %357 = vmatpush.bf16.msra.mxu0 0
      %358 = vmatpush.bf16.msra.mxu0 0
      %359 = vmatpush.bf16.msra.mxu0 0
      %360 = vmatpush.bf16.msra.mxu0 0
      %361 = vmatpush.bf16.msra.mxu0 %v352
      %362 = vmatmul.bf16.gmra.mxu0 %v348
      %v363 = vpop.f32.mrf.mxu0
      %v364 = vadd.f32 0.0, %v363
      %v365 = vpop.f32.mrf.mxu0
      %366 = vdwg.mxu0
      %v367 = vpack.c.bf16 %v364, %v364
      %vm368 = vcmask 60416
      %369 = vst.msk [vmem:[%s304] sm:$0xf] %vm368, %v367
      %p370 = scmp.lt.s32.totalorder %s19, 1
      %s371 = scalar_select %p370, %s19, 1
      %p372 = scmp.lt.s32.totalorder %s20, 3
      %s373 = scalar_select %p372, %s20, 3
      %s374 = smul.addr %s371, 4
      %s375 = sadd.s32 %s373, %s374
      %s376 = smul.addr %s375, 4
      %s377 = scalar_lea.vmem %s4, %s376
      // Predicated region
      $region37: #{bert_classifier_forward.13} parent=35 // pred_check
        %p378 = pneg %p157
      $region38: #{bert_classifier_forward.13} parent=35 // pred_check_branch
        %380 = sbr.rel (%p378) target = $region40
      $region39: #{bert_classifier_forward.13} parent=35 // pred_region
        _
      $region40: #{bert_classifier_forward.13} parent=35 // pred_fallthru
        _
    $region36: #{bert_classifier_forward.13} parent=5 // pred_fallthru
      _
    %p381 = scmp.le.s32.totalorder 2, %s10
    // Predicated region
    $region41: #{bert_classifier_forward.13} parent=5 // pred_check
      %p382 = pneg %p381
    $region42: #{bert_classifier_forward.13} parent=5 // pred_check_branch
      %384 = sbr.rel (%p382) target = $region44
    $region43: #{bert_classifier_forward.13} parent=5 // pred_region
      %s385 = ssub.s32 %s10, 2
      // Predicated region
      $region45: #{bert_classifier_forward.13} parent=43 // pred_check
        %p386 = pneg %p163
      $region46: #{bert_classifier_forward.13} parent=43 // pred_check_branch
        %388 = sbr.rel (%p386) target = $region48
      $region47: #{bert_classifier_forward.13} parent=43 // pred_region
        %p389 = scmp.lt.s32.totalorder %s21, 1
        %s390 = scalar_select %p389, %s21, 1
        %p391 = scmp.lt.s32.totalorder %s22, 3
        %s392 = scalar_select %p391, %s22, 3
        %s393 = smul.addr %s390, 4
        %s394 = sadd.s32 %s392, %s393
        %s395 = smul.addr %s394, 4
        %s396 = scalar_lea.vmem %s4, %s395
      $region48: #{bert_classifier_forward.13} parent=43 // pred_fallthru
        _
    $region44: #{bert_classifier_forward.13} parent=5 // pred_fallthru
      _
  $region6: #{bert_classifier_forward.13} parent=0 // loop_footer
    %s14 = sadd.s32 1, %s10
  $region7: #{bert_classifier_forward.13} parent=0 // loop_footer_branch
    %9 = sbr.rel target = $region3
  $region8: #{bert_classifier_forward.13} parent=0 // loop_exit
    _

// kernel: bert_classifier_forward.12
$region0: #{bert_classifier_forward.12}
  #allocation0 [shape = 'u32[]', space=smem, size = 0x4, offset = 0x4, fixed_abs, tag = 'smem constant byte address 0x4 - core index']
  #allocation1 [shape = 'u32[72,128]{1,0:T(1,128)}', space=vmem, size = 0x9000, scoped, tag = 'internal scratch']
  %s0 = inlined_call_operand.vmem [shape: bf16[16,32], index: 0, kind: input, shape index: {}]
  %s1 = inlined_call_operand.vmem [shape: bf16[32,96], index: 1, kind: input, shape index: {}]
  %s2 = inlined_call_operand.vmem [shape: f32[1,96], index: 2, kind: input, shape index: {}]
  %s3 = inlined_call_operand.vmem [shape: bf16[16,96], index: 3, kind: output, shape index: {}]
  %s4 = sld [smem:[#allocation0]]
  $region22: #{bert_classifier_forward.12} parent=0
    _
  %s6 = ssub.s32 1, %s4
  %s7 = scalar_select 0, %s6, %s4
  // Predicated region
  $region2: #{bert_classifier_forward.12} parent=0 // pred_check
    _
  $region3: #{bert_classifier_forward.12} parent=0 // pred_check_branch
    %9 = sbr.rel (0) target = $region5
  $region4: #{bert_classifier_forward.12} parent=0 // pred_region
    _
  $region5: #{bert_classifier_forward.12} parent=0 // pred_fallthru
    _
  // Predicated region
  $region6: #{bert_classifier_forward.12} parent=0 // pred_check
    _
  $region7: #{bert_classifier_forward.12} parent=0 // pred_check_branch
    %11 = sbr.rel (0) target = $region9
  $region8: #{bert_classifier_forward.12} parent=0 // pred_region
    _
  $region9: #{bert_classifier_forward.12} parent=0 // pred_fallthru
    _
  // Predicated region
  $region10: #{bert_classifier_forward.12} parent=0 // pred_check
    _
  $region11: #{bert_classifier_forward.12} parent=0 // pred_check_branch
    %13 = sbr.rel (0) target = $region13
  $region12: #{bert_classifier_forward.12} parent=0 // pred_region
    _
  $region13: #{bert_classifier_forward.12} parent=0 // pred_fallthru
    _
  %v15 = vld [vmem:[%s0] sm:$0xf]
  %v16 = vld [vmem:[%s0 + $0x4] sm:$0xf]
  %v17 = vld [vmem:[%s1] sm:$0xf]
  %v18 = vld [vmem:[%s1 + $0x4] sm:$0xf]
  %v19 = vld [vmem:[%s1 + $0x8] sm:$0xf]
  %v20 = vld [vmem:[%s1 + $0xc] sm:$0xf]
  %v21 = vld [vmem:[%s2] sm:$0x1]
  %v23 = vperm.slane %v21, 0
  %v27 = vunpack.c.l.b16 %v15
  %v28 = vunpack.c.l.b16 %v16
  %v29 = vpack.c.b16 %v28, %v27
  %v34 = vunpack.c.l.b16 %v17
  %v35 = vunpack.c.l.b16 %v18
  %v36 = vunpack.c.l.b16 %v19
  %v37 = vunpack.c.l.b16 %v20
  %v38 = vpack.c.b16 %v35, %v34
  %v39 = vpack.c.b16 %v37, %v36
  %vm42 = vcmask 261120
  %v44 = vsel %vm42, %v29, 0
  %46 = vmatpush.bf16.msra.mxu0 0
  %47 = vmatpush.bf16.msra.mxu0 0
  %48 = vmatpush.bf16.msra.mxu0 0
  %49 = vmatpush.bf16.msra.mxu0 0
  %50 = vmatpush.bf16.msra.mxu0 0
  %51 = vmatpush.bf16.msra.mxu0 0
  %52 = vmatpush.bf16.msra.mxu0 %v39
  %53 = vmatpush.bf16.msra.mxu0 %v38
  %54 = vmatmul.bf16.gmra.mxu0 %v44
  %v55 = vpop.f32.mrf.mxu0
  %v56 = vadd.f32 %v23, %v55
  %v57 = vpop.f32.mrf.mxu0
  %v58 = vadd.f32 %v23, %v57
  %59 = vdwg.mxu0
  %v60 = vpack.c.bf16 %v56, %v56
  %v61 = vpack.c.bf16 %v58, %v58
  %vm62 = vcmask 781312
  %63 = vst.msk [vmem:[%s3] sm:$0xf] %vm62, %v60
  %64 = vst.msk [vmem:[%s3 + $0x4] sm:$0xf] %vm62, %v61
  // Predicated region
  $region14: #{bert_classifier_forward.12} parent=0 // pred_check
    _
  $region15: #{bert_classifier_forward.12} parent=0 // pred_check_branch
    %66 = sbr.rel (0) target = $region17
  $region16: #{bert_classifier_forward.12} parent=0 // pred_region
    _
  $region17: #{bert_classifier_forward.12} parent=0 // pred_fallthru
    _
  // Predicated region
  $region18: #{bert_classifier_forward.12} parent=0 // pred_check
    _
  $region19: #{bert_classifier_forward.12} parent=0 // pred_check_branch
    %68 = sbr.rel (0) target = $region21
  $region20: #{bert_classifier_forward.12} parent=0 // pred_region
    _
  $region21: #{bert_classifier_forward.12} parent=0 // pred_fallthru
    _

// kernel: bert_classifier_forward.14
$region0: #{bert_classifier_forward.14}
  #allocation0 [shape = 'u32[]', space=smem, size = 0x4, offset = 0x4, fixed_abs, tag = 'smem constant byte address 0x4 - core index']
  #allocation1 [shape = 'u32[72,128]{1,0:T(1,128)}', space=vmem, size = 0x9000, scoped, tag = 'internal scratch']
  %s0 = inlined_call_operand.vmem [shape: bf16[16,32], index: 0, kind: input, shape index: {}]
  %s1 = inlined_call_operand.vmem [shape: bf16[32,32], index: 1, kind: input, shape index: {}]
  %s2 = inlined_call_operand.vmem [shape: f32[1,32], index: 2, kind: input, shape index: {}]
  %s3 = inlined_call_operand.vmem [shape: bf16[16,32], index: 3, kind: input, shape index: {}]
  %s4 = inlined_call_operand.vmem [shape: f32[1,32], index: 4, kind: input, shape index: {}]
  %s5 = inlined_call_operand.vmem [shape: f32[1,32], index: 5, kind: input, shape index: {}]
  %s6 = inlined_call_operand.vmem [shape: bf16[16,32], index: 6, kind: output, shape index: {}]
  %s7 = sld [smem:[#allocation0]]
  $region34: #{bert_classifier_forward.14} parent=0
    _
  %s9 = ssub.s32 1, %s7
  %s10 = scalar_select 0, %s9, %s7
  // Predicated region
  $region2: #{bert_classifier_forward.14} parent=0 // pred_check
    _
  $region3: #{bert_classifier_forward.14} parent=0 // pred_check_branch
    %12 = sbr.rel (0) target = $region5
  $region4: #{bert_classifier_forward.14} parent=0 // pred_region
    _
  $region5: #{bert_classifier_forward.14} parent=0 // pred_fallthru
    _
  // Predicated region
  $region6: #{bert_classifier_forward.14} parent=0 // pred_check
    _
  $region7: #{bert_classifier_forward.14} parent=0 // pred_check_branch
    %14 = sbr.rel (0) target = $region9
  $region8: #{bert_classifier_forward.14} parent=0 // pred_region
    _
  $region9: #{bert_classifier_forward.14} parent=0 // pred_fallthru
    _
  // Predicated region
  $region10: #{bert_classifier_forward.14} parent=0 // pred_check
    _
  $region11: #{bert_classifier_forward.14} parent=0 // pred_check_branch
    %16 = sbr.rel (0) target = $region13
  $region12: #{bert_classifier_forward.14} parent=0 // pred_region
    _
  $region13: #{bert_classifier_forward.14} parent=0 // pred_fallthru
    _
  // Predicated region
  $region14: #{bert_classifier_forward.14} parent=0 // pred_check
    _
  $region15: #{bert_classifier_forward.14} parent=0 // pred_check_branch
    %18 = sbr.rel (0) target = $region17
  $region16: #{bert_classifier_forward.14} parent=0 // pred_region
    _
  $region17: #{bert_classifier_forward.14} parent=0 // pred_fallthru
    _
  // Predicated region
  $region18: #{bert_classifier_forward.14} parent=0 // pred_check
    _
  $region19: #{bert_classifier_forward.14} parent=0 // pred_check_branch
    %20 = sbr.rel (0) target = $region21
  $region20: #{bert_classifier_forward.14} parent=0 // pred_region
    _
  $region21: #{bert_classifier_forward.14} parent=0 // pred_fallthru
    _
  // Predicated region
  $region22: #{bert_classifier_forward.14} parent=0 // pred_check
    _
  $region23: #{bert_classifier_forward.14} parent=0 // pred_check_branch
    %22 = sbr.rel (0) target = $region25
  $region24: #{bert_classifier_forward.14} parent=0 // pred_region
    _
  $region25: #{bert_classifier_forward.14} parent=0 // pred_fallthru
    _
  %v24 = vld [vmem:[%s0] sm:$0xf]
  %v25 = vld [vmem:[%s0 + $0x4] sm:$0xf]
  %v26 = vld [vmem:[%s1] sm:$0xf]
  %v27 = vld [vmem:[%s1 + $0x4] sm:$0xf]
  %v28 = vld [vmem:[%s1 + $0x8] sm:$0xf]
  %v29 = vld [vmem:[%s1 + $0xc] sm:$0xf]
  %v30 = vld [vmem:[%s2] sm:$0x1]
  %v32 = vperm.slane %v30, 0
  %v36 = vunpack.c.l.b16 %v24
  %v37 = vunpack.c.l.b16 %v25
  %v38 = vpack.c.b16 %v37, %v36
  %v43 = vunpack.c.l.b16 %v26
  %v44 = vunpack.c.l.b16 %v27
  %v45 = vunpack.c.l.b16 %v28
  %v46 = vunpack.c.l.b16 %v29
  %v47 = vpack.c.b16 %v44, %v43
  %v48 = vpack.c.b16 %v46, %v45
  %vm51 = vcmask 261120
  %v53 = vsel %vm51, %v38, 0
  %55 = vmatpush.bf16.msra.mxu0 0
  %56 = vmatpush.bf16.msra.mxu0 0
  %57 = vmatpush.bf16.msra.mxu0 0
  %58 = vmatpush.bf16.msra.mxu0 0
  %59 = vmatpush.bf16.msra.mxu0 0
  %60 = vmatpush.bf16.msra.mxu0 0
  %61 = vmatpush.bf16.msra.mxu0 %v48
  %62 = vmatpush.bf16.msra.mxu0 %v47
  %63 = vmatmul.bf16.gmra.mxu0 %v53
  %v64 = vpop.f32.mrf.mxu0
  %v65 = vadd.f32 %v32, %v64
  %v66 = vpop.f32.mrf.mxu0
  %v67 = vadd.f32 %v32, %v66
  %68 = vdwg.mxu0
  %v69 = vld [vmem:[%s3] sm:$0xf]
  %v70 = vld [vmem:[%s3 + $0x4] sm:$0xf]
  %v71 = vunpack.c.l.bf16 %v69
  %v72 = vunpack.c.l.bf16 %v70
  %v73 = vadd.f32 %v65, %v71
  %v74 = vadd.f32 %v67, %v72
  %v75 = vsel %vm51, %v73, 0.0
  %76 = vadd.xlane.f32.xlu0 %v75
  %v77 = vpop.xlane.xlu0 %76
  %v78 = vsel %vm51, %v74, 0.0
  %79 = vadd.xlane.f32.xlu0 %v78
  %v80 = vpop.xlane.xlu0 %79
  %v81 = vrcp.pop 32.0
  %v82 = vmul.f32 32.0, %v81
  %v83 = vsub.f32 1.0, %v82
  %v84 = vmul.f32 %v81, %v83
  %v85 = vadd.f32 %v81, %v84
  %vm86 = vweird.f32 %v81
  %v87 = vsel %vm86, %v81, %v85
  %v88 = vmul.f32 %v77, %v87
  %v89 = vmul.f32 %v80, %v87
  %v90 = vsub.f32 %v73, %v88
  %v91 = vsub.f32 %v74, %v89
  %v92 = vmul.f32 %v90, %v90
  %v93 = vmul.f32 %v91, %v91
  %v94 = vsel %vm51, %v92, 0.0
  %95 = vadd.xlane.f32.xlu0 %v94
  %v96 = vpop.xlane.xlu0 %95
  %v97 = vsel %vm51, %v93, 0.0
  %98 = vadd.xlane.f32.xlu0 %v97
  %v99 = vpop.xlane.xlu0 %98
  %v100 = vmul.f32 %v96, %v87
  %v101 = vmul.f32 %v99, %v87
  %v102 = vadd.f32 %v100, 1e-12
  %v103 = vadd.f32 %v101, 1e-12
  %v104 = vrsqrt.pop %v102
  %v105 = vmul.f32 %v104, %v102
  %v106 = vmul.f32 %v105, %v104
  %v107 = vmul.f32 0.5, %v106
  %v108 = vsub.f32 1.5, %v107
  %v109 = vmul.f32 %v104, %v108
  %vm110 = vweird.f32 %v102
  %vm111 = vweird.f32 %v104
  %vm112 = vmor %vm110, %vm111
  %v113 = vsel %vm112, %v104, %v109
  %v114 = vrsqrt.pop %v103
  %v115 = vmul.f32 %v114, %v103
  %v116 = vmul.f32 %v115, %v114
  %v117 = vmul.f32 0.5, %v116
  %v118 = vsub.f32 1.5, %v117
  %v119 = vmul.f32 %v114, %v118
  %vm120 = vweird.f32 %v103
  %vm121 = vweird.f32 %v114
  %vm122 = vmor %vm120, %vm121
  %v123 = vsel %vm122, %v114, %v119
  %v124 = vmul.f32 %v90, %v113
  %v125 = vmul.f32 %v91, %v123
  %v126 = vld [vmem:[%s4] sm:$0x1]
  %v128 = vperm.slane %v126, 0
  %v130 = vmul.f32 %v124, %v128
  %v131 = vmul.f32 %v125, %v128
  %v132 = vld [vmem:[%s5] sm:$0x1]
  %v134 = vperm.slane %v132, 0
  %v136 = vadd.f32 %v130, %v134
  %v137 = vadd.f32 %v131, %v134
  %v138 = vpack.c.bf16 %v136, %v136
  %v139 = vpack.c.bf16 %v137, %v137
  %vm140 = vcmask 257024
  %141 = vst.msk [vmem:[%s6] sm:$0xf] %vm140, %v138
  %142 = vst.msk [vmem:[%s6 + $0x4] sm:$0xf] %vm140, %v139
  // Predicated region
  $region26: #{bert_classifier_forward.14} parent=0 // pred_check
    _
  $region27: #{bert_classifier_forward.14} parent=0 // pred_check_branch
    %144 = sbr.rel (0) target = $region29
  $region28: #{bert_classifier_forward.14} parent=0 // pred_region
    _
  $region29: #{bert_classifier_forward.14} parent=0 // pred_fallthru
    _
  // Predicated region
  $region30: #{bert_classifier_forward.14} parent=0 // pred_check
    _
  $region31: #{bert_classifier_forward.14} parent=0 // pred_check_branch
    %146 = sbr.rel (0) target = $region33
  $region32: #{bert_classifier_forward.14} parent=0 // pred_region
    _
  $region33: #{bert_classifier_forward.14} parent=0 // pred_fallthru
    _

// kernel: bert_classifier_forward.15
$region0: #{bert_classifier_forward.15}
  #allocation0 [shape = 'u32[]', space=smem, size = 0x4, offset = 0x4, fixed_abs, tag = 'smem constant byte address 0x4 - core index']
  #allocation1 [shape = 'u32[72,128]{1,0:T(1,128)}', space=vmem, size = 0x9000, scoped, tag = 'internal scratch']
  %s0 = inlined_call_operand.vmem [shape: bf16[16,32], index: 0, kind: input, shape index: {}]
  %s1 = inlined_call_operand.vmem [shape: bf16[32,64], index: 1, kind: input, shape index: {}]
  %s2 = inlined_call_operand.vmem [shape: f32[1,64], index: 2, kind: input, shape index: {}]
  %s3 = inlined_call_operand.vmem [shape: bf16[16,64], index: 3, kind: output, shape index: {}]
  %s4 = sld [smem:[#allocation0]]
  $region22: #{bert_classifier_forward.15} parent=0
    _
  %s6 = ssub.s32 1, %s4
  %s7 = scalar_select 0, %s6, %s4
  // Predicated region
  $region2: #{bert_classifier_forward.15} parent=0 // pred_check
    _
  $region3: #{bert_classifier_forward.15} parent=0 // pred_check_branch
    %9 = sbr.rel (0) target = $region5
  $region4: #{bert_classifier_forward.15} parent=0 // pred_region
    _
  $region5: #{bert_classifier_forward.15} parent=0 // pred_fallthru
    _
  // Predicated region
  $region6: #{bert_classifier_forward.15} parent=0 // pred_check
    _
  $region7: #{bert_classifier_forward.15} parent=0 // pred_check_branch
    %11 = sbr.rel (0) target = $region9
  $region8: #{bert_classifier_forward.15} parent=0 // pred_region
    _
  $region9: #{bert_classifier_forward.15} parent=0 // pred_fallthru
    _
  // Predicated region
  $region10: #{bert_classifier_forward.15} parent=0 // pred_check
    _
  $region11: #{bert_classifier_forward.15} parent=0 // pred_check_branch
    %13 = sbr.rel (0) target = $region13
  $region12: #{bert_classifier_forward.15} parent=0 // pred_region
    _
  $region13: #{bert_classifier_forward.15} parent=0 // pred_fallthru
    _
  %v15 = vld [vmem:[%s0] sm:$0xf]
  %v16 = vld [vmem:[%s0 + $0x4] sm:$0xf]
  %v17 = vld [vmem:[%s1] sm:$0xf]
  %v18 = vld [vmem:[%s1 + $0x4] sm:$0xf]
  %v19 = vld [vmem:[%s1 + $0x8] sm:$0xf]
  %v20 = vld [vmem:[%s1 + $0xc] sm:$0xf]
  %v21 = vld [vmem:[%s2] sm:$0x1]
  %v23 = vperm.slane %v21, 0
  %v27 = vunpack.c.l.b16 %v15
  %v28 = vunpack.c.l.b16 %v16
  %v29 = vpack.c.b16 %v28, %v27
  %v34 = vunpack.c.l.b16 %v17
  %v35 = vunpack.c.l.b16 %v18
  %v36 = vunpack.c.l.b16 %v19
  %v37 = vunpack.c.l.b16 %v20
  %v38 = vpack.c.b16 %v35, %v34
  %v39 = vpack.c.b16 %v37, %v36
  %vm42 = vcmask 261120
  %v44 = vsel %vm42, %v29, 0
  %46 = vmatpush.bf16.msra.mxu0 0
  %47 = vmatpush.bf16.msra.mxu0 0
  %48 = vmatpush.bf16.msra.mxu0 0
  %49 = vmatpush.bf16.msra.mxu0 0
  %50 = vmatpush.bf16.msra.mxu0 0
  %51 = vmatpush.bf16.msra.mxu0 0
  %52 = vmatpush.bf16.msra.mxu0 %v39
  %53 = vmatpush.bf16.msra.mxu0 %v38
  %54 = vmatmul.bf16.gmra.mxu0 %v44
  %v55 = vpop.f32.mrf.mxu0
  %v56 = vadd.f32 %v23, %v55
  %v57 = vpop.f32.mrf.mxu0
  %v58 = vadd.f32 %v23, %v57
  %59 = vdwg.mxu0
  %v60 = vmul.f32 %v56, %v56
  %v61 = vmul.f32 %v58, %v58
  %v62 = vmul.f32 %v56, %v60
  %v63 = vmul.f32 %v58, %v61
  %v64 = vmul.f32 %v62, 0.044715
  %v65 = vmul.f32 %v63, 0.044715
  %v66 = vadd.f32 %v56, %v64
  %v67 = vadd.f32 %v58, %v65
  %v68 = vmul.f32 %v66, 0.7978846
  %v69 = vmul.f32 %v67, 0.7978846
  %v70 = vtanh.pop %v68
  %v71 = vtanh.pop %v69
  %v72 = vadd.f32 %v70, 1.0
  %v73 = vadd.f32 %v71, 1.0
  %v74 = vmul.f32 %v72, 0.5
  %v75 = vmul.f32 %v73, 0.5
  %v76 = vmul.f32 %v56, %v74
  %v77 = vmul.f32 %v58, %v75
  %v78 = vpack.c.bf16 %v76, %v76
  %v79 = vpack.c.bf16 %v77, %v77
  %vm80 = vcmask 519168
  %81 = vst.msk [vmem:[%s3] sm:$0xf] %vm80, %v78
  %82 = vst.msk [vmem:[%s3 + $0x4] sm:$0xf] %vm80, %v79
  // Predicated region
  $region14: #{bert_classifier_forward.15} parent=0 // pred_check
    _
  $region15: #{bert_classifier_forward.15} parent=0 // pred_check_branch
    %84 = sbr.rel (0) target = $region17
  $region16: #{bert_classifier_forward.15} parent=0 // pred_region
    _
  $region17: #{bert_classifier_forward.15} parent=0 // pred_fallthru
    _
  // Predicated region
  $region18: #{bert_classifier_forward.15} parent=0 // pred_check
    _
  $region19: #{bert_classifier_forward.15} parent=0 // pred_check_branch
    %86 = sbr.rel (0) target = $region21
  $region20: #{bert_classifier_forward.15} parent=0 // pred_region
    _
  $region21: #{bert_classifier_forward.15} parent=0 // pred_fallthru
    _

// kernel: bert_classifier_forward.16
$region0: #{bert_classifier_forward.16}
  #allocation0 [shape = 'u32[]', space=smem, size = 0x4, offset = 0x4, fixed_abs, tag = 'smem constant byte address 0x4 - core index']
  #allocation1 [shape = 'u32[72,128]{1,0:T(1,128)}', space=vmem, size = 0x9000, scoped, tag = 'internal scratch']
  %s0 = inlined_call_operand.vmem [shape: bf16[16,64], index: 0, kind: input, shape index: {}]
  %s1 = inlined_call_operand.vmem [shape: bf16[64,32], index: 1, kind: input, shape index: {}]
  %s2 = inlined_call_operand.vmem [shape: f32[1,32], index: 2, kind: input, shape index: {}]
  %s3 = inlined_call_operand.vmem [shape: bf16[16,32], index: 3, kind: input, shape index: {}]
  %s4 = inlined_call_operand.vmem [shape: f32[1,32], index: 4, kind: input, shape index: {}]
  %s5 = inlined_call_operand.vmem [shape: f32[1,32], index: 5, kind: input, shape index: {}]
  %s6 = inlined_call_operand.vmem [shape: bf16[16,32], index: 6, kind: output, shape index: {}]
  %s7 = sld [smem:[#allocation0]]
  $region34: #{bert_classifier_forward.16} parent=0
    _
  %s9 = ssub.s32 1, %s7
  %s10 = scalar_select 0, %s9, %s7
  // Predicated region
  $region2: #{bert_classifier_forward.16} parent=0 // pred_check
    _
  $region3: #{bert_classifier_forward.16} parent=0 // pred_check_branch
    %12 = sbr.rel (0) target = $region5
  $region4: #{bert_classifier_forward.16} parent=0 // pred_region
    _
  $region5: #{bert_classifier_forward.16} parent=0 // pred_fallthru
    _
  // Predicated region
  $region6: #{bert_classifier_forward.16} parent=0 // pred_check
    _
  $region7: #{bert_classifier_forward.16} parent=0 // pred_check_branch
    %14 = sbr.rel (0) target = $region9
  $region8: #{bert_classifier_forward.16} parent=0 // pred_region
    _
  $region9: #{bert_classifier_forward.16} parent=0 // pred_fallthru
    _
  // Predicated region
  $region10: #{bert_classifier_forward.16} parent=0 // pred_check
    _
  $region11: #{bert_classifier_forward.16} parent=0 // pred_check_branch
    %16 = sbr.rel (0) target = $region13
  $region12: #{bert_classifier_forward.16} parent=0 // pred_region
    _
  $region13: #{bert_classifier_forward.16} parent=0 // pred_fallthru
    _
  // Predicated region
  $region14: #{bert_classifier_forward.16} parent=0 // pred_check
    _
  $region15: #{bert_classifier_forward.16} parent=0 // pred_check_branch
    %18 = sbr.rel (0) target = $region17
  $region16: #{bert_classifier_forward.16} parent=0 // pred_region
    _
  $region17: #{bert_classifier_forward.16} parent=0 // pred_fallthru
    _
  // Predicated region
  $region18: #{bert_classifier_forward.16} parent=0 // pred_check
    _
  $region19: #{bert_classifier_forward.16} parent=0 // pred_check_branch
    %20 = sbr.rel (0) target = $region21
  $region20: #{bert_classifier_forward.16} parent=0 // pred_region
    _
  $region21: #{bert_classifier_forward.16} parent=0 // pred_fallthru
    _
  // Predicated region
  $region22: #{bert_classifier_forward.16} parent=0 // pred_check
    _
  $region23: #{bert_classifier_forward.16} parent=0 // pred_check_branch
    %22 = sbr.rel (0) target = $region25
  $region24: #{bert_classifier_forward.16} parent=0 // pred_region
    _
  $region25: #{bert_classifier_forward.16} parent=0 // pred_fallthru
    _
  %v24 = vld [vmem:[%s0] sm:$0xf]
  %v25 = vld [vmem:[%s0 + $0x4] sm:$0xf]
  %v26 = vld [vmem:[%s1] sm:$0xf]
  %v27 = vld [vmem:[%s1 + $0x4] sm:$0xf]
  %v28 = vld [vmem:[%s1 + $0x8] sm:$0xf]
  %v29 = vld [vmem:[%s1 + $0xc] sm:$0xf]
  %v30 = vld [vmem:[%s1 + $0x10] sm:$0xf]
  %v31 = vld [vmem:[%s1 + $0x14] sm:$0xf]
  %v32 = vld [vmem:[%s1 + $0x18] sm:$0xf]
  %v33 = vld [vmem:[%s1 + $0x1c] sm:$0xf]
  %v34 = vld [vmem:[%s2] sm:$0x1]
  %v36 = vperm.slane %v34, 0
  %v40 = vunpack.c.l.b16 %v24
  %v41 = vunpack.c.l.b16 %v25
  %v42 = vpack.c.b16 %v41, %v40
  %v51 = vunpack.c.l.b16 %v26
  %v52 = vunpack.c.l.b16 %v27
  %v53 = vunpack.c.l.b16 %v28
  %v54 = vunpack.c.l.b16 %v29
  %v55 = vunpack.c.l.b16 %v30
  %v56 = vunpack.c.l.b16 %v31
  %v57 = vunpack.c.l.b16 %v32
  %v58 = vunpack.c.l.b16 %v33
  %v59 = vpack.c.b16 %v52, %v51
  %v60 = vpack.c.b16 %v54, %v53
  %v61 = vpack.c.b16 %v56, %v55
  %v62 = vpack.c.b16 %v58, %v57
  %vm67 = vcmask 523264
  %v69 = vsel %vm67, %v42, 0
  %71 = vmatpush.bf16.msra.mxu0 0
  %72 = vmatpush.bf16.msra.mxu0 0
  %73 = vmatpush.bf16.msra.mxu0 0
  %74 = vmatpush.bf16.msra.mxu0 0
  %75 = vmatpush.bf16.msra.mxu0 %v62
  %76 = vmatpush.bf16.msra.mxu0 %v61
  %77 = vmatpush.bf16.msra.mxu0 %v60
  %78 = vmatpush.bf16.msra.mxu0 %v59
  %79 = vmatmul.bf16.gmra.mxu0 %v69
  %v80 = vpop.f32.mrf.mxu0
  %v81 = vadd.f32 %v36, %v80
  %v82 = vpop.f32.mrf.mxu0
  %v83 = vadd.f32 %v36, %v82
  %84 = vdwg.mxu0
  %v85 = vld [vmem:[%s3] sm:$0xf]
  %v86 = vld [vmem:[%s3 + $0x4] sm:$0xf]
  %v87 = vunpack.c.l.bf16 %v85
  %v88 = vunpack.c.l.bf16 %v86
  %v89 = vadd.f32 %v81, %v87
  %v90 = vadd.f32 %v83, %v88
  %vm91 = vcmask 261120
  %v92 = vsel %vm91, %v89, 0.0
  %93 = vadd.xlane.f32.xlu0 %v92
  %v94 = vpop.xlane.xlu0 %93
  %v95 = vsel %vm91, %v90, 0.0
  %96 = vadd.xlane.f32.xlu0 %v95
  %v97 = vpop.xlane.xlu0 %96
  %v98 = vrcp.pop 32.0
  %v99 = vmul.f32 32.0, %v98
  %v100 = vsub.f32 1.0, %v99
  %v101 = vmul.f32 %v98, %v100
  %v102 = vadd.f32 %v98, %v101
  %vm103 = vweird.f32 %v98
  %v104 = vsel %vm103, %v98, %v102
  %v105 = vmul.f32 %v94, %v104
  %v106 = vmul.f32 %v97, %v104
  %v107 = vsub.f32 %v89, %v105
  %v108 = vsub.f32 %v90, %v106
  %v109 = vmul.f32 %v107, %v107
  %v110 = vmul.f32 %v108, %v108
  %v111 = vsel %vm91, %v109, 0.0
  %112 = vadd.xlane.f32.xlu0 %v111
  %v113 = vpop.xlane.xlu0 %112
  %v114 = vsel %vm91, %v110, 0.0
  %115 = vadd.xlane.f32.xlu0 %v114
  %v116 = vpop.xlane.xlu0 %115
  %v117 = vmul.f32 %v113, %v104
  %v118 = vmul.f32 %v116, %v104
  %v119 = vadd.f32 %v117, 1e-12
  %v120 = vadd.f32 %v118, 1e-12
  %v121 = vrsqrt.pop %v119
  %v122 = vmul.f32 %v121, %v119
  %v123 = vmul.f32 %v122, %v121
  %v124 = vmul.f32 0.5, %v123
  %v125 = vsub.f32 1.5, %v124
  %v126 = vmul.f32 %v121, %v125
  %vm127 = vweird.f32 %v119
  %vm128 = vweird.f32 %v121
  %vm129 = vmor %vm127, %vm128
  %v130 = vsel %vm129, %v121, %v126
  %v131 = vrsqrt.pop %v120
  %v132 = vmul.f32 %v131, %v120
  %v133 = vmul.f32 %v132, %v131
  %v134 = vmul.f32 0.5, %v133
  %v135 = vsub.f32 1.5, %v134
  %v136 = vmul.f32 %v131, %v135
  %vm137 = vweird.f32 %v120
  %vm138 = vweird.f32 %v131
  %vm139 = vmor %vm137, %vm138
  %v140 = vsel %vm139, %v131, %v136
  %v141 = vmul.f32 %v107, %v130
  %v142 = vmul.f32 %v108, %v140
  %v143 = vld [vmem:[%s4] sm:$0x1]
  %v145 = vperm.slane %v143, 0
  %v147 = vmul.f32 %v141, %v145
  %v148 = vmul.f32 %v142, %v145
  %v149 = vld [vmem:[%s5] sm:$0x1]
  %v151 = vperm.slane %v149, 0
  %v153 = vadd.f32 %v147, %v151
  %v154 = vadd.f32 %v148, %v151
  %v155 = vpack.c.bf16 %v153, %v153
  %v156 = vpack.c.bf16 %v154, %v154
  %vm157 = vcmask 257024
  %158 = vst.msk [vmem:[%s6] sm:$0xf] %vm157, %v155
  %159 = vst.msk [vmem:[%s6 + $0x4] sm:$0xf] %vm157, %v156
  // Predicated region
  $region26: #{bert_classifier_forward.16} parent=0 // pred_check
    _
  $region27: #{bert_classifier_forward.16} parent=0 // pred_check_branch
    %161 = sbr.rel (0) target = $region29
  $region28: #{bert_classifier_forward.16} parent=0 // pred_region
    _
  $region29: #{bert_classifier_forward.16} parent=0 // pred_fallthru
    _
  // Predicated region
  $region30: #{bert_classifier_forward.16} parent=0 // pred_check
    _
  $region31: #{bert_classifier_forward.16} parent=0 // pred_check_branch
    %163 = sbr.rel (0) target = $region33
  $region32: #{bert_classifier_forward.16} parent=0 // pred_region
    _
  $region33: #{bert_classifier_forward.16} parent=0 // pred_fallthru
    _

</llo_original>
